<compile_context>
chip_gen: v6e
topology: v6e:2x2x1
jax: 0.10.0
libtpu: 0.0.40
codegen_flags: <defaults>
</compile_context>

<pallas_src>
import math

import jax
import jax.numpy as jnp
from jax.experimental import pallas as pl
from jax.experimental.pallas import tpu as pltpu

B, S, D = 2, 8, 32       # batch, sequence, model dim
H, DK = 4, 8             # heads, head dim (H * DK == D)
DFF = 64                 # feed-forward hidden dim
BS = B * S               # flattened token count
EPS = 1e-6


def _layer_norm_ref(v, a, b):
    # Reference LayerNorm: torch .std() is unbiased (ddof=1); denom is (std + eps).
    mean = jnp.mean(v, axis=-1, keepdims=True)
    var = jnp.sum((v - mean) ** 2, axis=-1, keepdims=True) / (v.shape[-1] - 1)
    std = jnp.sqrt(var)
    return a * (v - mean) / (std + EPS) + b


def encoder_layer_kernel(x_ref, addmask_ref, wqkv_ref, wo_ref, w1_ref, w2_ref,
                         vecs_ref, out_ref):
    def layer_norm(v, a, b):
        mean = jnp.mean(v, axis=-1, keepdims=True)
        var = jnp.sum((v - mean) ** 2, axis=-1, keepdims=True) / (v.shape[-1] - 1)
        inv = pl.reciprocal(jnp.sqrt(var) + EPS, approx=False)   # EUP, off the VALU path
        return a * (v - mean) * inv + b

    x = x_ref[...]                                # (B*S, D) = (16, 32), both batches at once

    # Packed 1-row params: [ln1a, ln1b, ln2a, ln2b, bqkv, bo, b1, b2] in an (8, 3D) slab.
    vecs = vecs_ref[...]
    ln1a = vecs[0:1, :D]
    ln1b = vecs[1:2, :D]
    ln2a = vecs[2:3, :D]
    ln2b = vecs[3:4, :D]
    bqkv = vecs[4:5, :]                           # (1, 3D)
    bo = vecs[5:6, :D]
    b1 = vecs[6:7, :DFF]
    b2 = vecs[7:8, :D]

    add_mask = addmask_ref[...]                   # (B*S, B*S) additive mask (0 / -1e9)

    # ---- sublayer 0: x + self_attn(norm(x)) ----
    xn = layer_norm(x, ln1a, ln1b)
    # Fused QKV projection; 1/sqrt(DK) already folded into the Q columns.
    qkv = jnp.dot(xn, wqkv_ref[...], preferred_element_type=jnp.float32) + bqkv   # (16, 96)

    # Per-head scores on the flat token axis (2-D MXU dots only), stacked along
    # sublanes so the softmax (max/exp/sum/reciprocal) runs exactly once.
    s_rows = []
    for h in range(H):                            # static unrolled, H = 4
        lo = h * DK
        qh = qkv[:, lo:lo + DK]                   # (16, 8)
        kh = qkv[:, D + lo:D + lo + DK]           # (16, 8)
        s_rows.append(jnp.dot(qh, kh.T, preferred_element_type=jnp.float32) + add_mask)
    s = jnp.concatenate(s_rows, axis=0)           # (H*B*S, B*S) = (64, 16)
    s = s - jnp.max(s, axis=-1, keepdims=True)
    e = jnp.exp(s)                                # masked / cross-batch entries -> exactly 0
    p = e * pl.reciprocal(jnp.sum(e, axis=-1, keepdims=True), approx=False)

    # Context + fused output projection: accumulate ctx_h @ Wo_h (no lane concat).
    wo_all = wo_ref[...]                          # (H, DK, D)
    attn = None
    for h in range(H):
        lo = h * DK
        vh = qkv[:, 2 * D + lo:2 * D + lo + DK]   # (16, 8)
        ph = p[h * BS:(h + 1) * BS, :]            # (16, 16), aligned sublane slice
        ctx = jnp.dot(ph, vh, preferred_element_type=jnp.float32)          # (16, 8)
        contrib = jnp.dot(ctx, wo_all[h], preferred_element_type=jnp.float32)  # (16, 32)
        attn = contrib if attn is None else attn + contrib
    x1 = x + attn + bo                            # dropout = identity (eval)

    # ---- sublayer 1: x + feed_forward(norm(x)) ----
    xn2 = layer_norm(x1, ln2a, ln2b)
    hid = jnp.maximum(
        jnp.dot(xn2, w1_ref[...], preferred_element_type=jnp.float32) + b1, 0.0)
    ff = jnp.dot(hid, w2_ref[...], preferred_element_type=jnp.float32) + b2

    out_ref[...] = (x1 + ff).astype(out_ref.dtype)   # (B*S, D); reshaped outside


def pack_params(params):
    (ln1a, ln1b, wq, bq, wk, bk, wv, bv, wo, bo,
     ln2a, ln2b, w1, b1, w2, b2) = params
    scale = 1.0 / math.sqrt(DK)                       # fold 1/sqrt(dk) into Q projection
    wqkv = jnp.concatenate([wq * scale, wk, wv], axis=1)   # (D, 3D)
    bqkv = jnp.concatenate([bq * scale, bk, bv], axis=1)   # (1, 3D)
    wo_hd = wo.reshape(H, DK, D)                            # head-major rows of wo
    width = 3 * D

    def row(v):
        v = v.reshape(1, -1)
        return jnp.pad(v, ((0, 0), (0, width - v.shape[1])))

    vecs = jnp.concatenate(
        [row(ln1a), row(ln1b), row(ln2a), row(ln2b),
         row(bqkv), row(bo), row(b1), row(b2)], axis=0)     # (8, 3D)
    return wqkv, wo_hd, w1, w2, vecs


def build_additive_mask(mask):
    # mask: (B, 1, S), 1 = attend, 0 = masked.  Returns (B*S, B*S) f32 additive mask:
    # 0 where (same batch AND key not masked), -1e9 elsewhere.  After row-max
    # subtraction exp() underflows to exactly 0 for the -1e9 entries, so a softmax
    # over the flat token axis equals the per-batch masked_fill softmax.
    bid = jnp.arange(BS, dtype=jnp.int32) // S
    same = bid[:, None] == bid[None, :]               # (BS, BS)
    key_ok = (mask.reshape(BS) != 0)[None, :]         # (1, BS)
    return jnp.where(same & key_ok, 0.0, -1e9).astype(jnp.float32)


@jax.jit
def encoder_layer(x, mask, params):
    wqkv, wo_hd, w1, w2, vecs = pack_params(params)
    add_mask = build_additive_mask(mask)
    x2d = x.reshape(BS, D)                            # free contiguous reshape in HBM

    vmem = lambda: pl.BlockSpec(memory_space=pltpu.MemorySpace.VMEM)
    out2d = pl.pallas_call(
        encoder_layer_kernel,
        out_shape=jax.ShapeDtypeStruct((BS, D), jnp.float32),
        in_specs=[vmem() for _ in range(7)],
        out_specs=vmem(),
    )(x2d, add_mask, wqkv, wo_hd, w1, w2, vecs)
    return out2d.reshape(B, S, D)


def init_params(key):
    ks = jax.random.split(key, 12)

    def lin(kw, kb, din, dout):
        w = jax.random.normal(kw, (din, dout), jnp.float32) * (1.0 / math.sqrt(din))
        b = jax.random.normal(kb, (1, dout), jnp.float32) * 0.02
        return w, b

    wq, bq = lin(ks[0], ks[1], D, D)
    wk, bk = lin(ks[2], ks[3], D, D)
    wv, bv = lin(ks[4], ks[5], D, D)
    wo, bo = lin(ks[6], ks[7], D, D)
    w1, b1 = lin(ks[8], ks[9], D, DFF)
    w2, b2 = lin(ks[10], ks[11], DFF, D)
    ln1a = jnp.ones((1, D), jnp.float32); ln1b = jnp.zeros((1, D), jnp.float32)
    ln2a = jnp.ones((1, D), jnp.float32); ln2b = jnp.zeros((1, D), jnp.float32)
    return [ln1a, ln1b, wq, bq, wk, bk, wv, bv, wo, bo, ln2a, ln2b, w1, b1, w2, b2]


def reference(x, mask, params):
    (ln1a, ln1b, wq, bq, wk, bk, wv, bv, wo, bo,
     ln2a, ln2b, w1, b1, w2, b2) = params
    outs = []
    for bidx in range(B):
        xb = x[bidx]
        mb = mask[bidx]
        xn = _layer_norm_ref(xb, ln1a, ln1b)
        q = xn @ wq + bq
        k = xn @ wk + bk
        v = xn @ wv + bv
        heads = []
        for h in range(H):
            lo = h * DK
            s = (q[:, lo:lo + DK] @ k[:, lo:lo + DK].T) / math.sqrt(DK)
            s = jnp.where(mb == 0, -1e9, s)
            p = jax.nn.softmax(s, axis=-1)
            heads.append(p @ v[:, lo:lo + DK])
        attn = jnp.concatenate(heads, axis=-1) @ wo + bo
        x1 = xb + attn
        xn2 = _layer_norm_ref(x1, ln2a, ln2b)
        ff = jnp.maximum(xn2 @ w1 + b1, 0.0) @ w2 + b2
        outs.append(x1 + ff)
    return jnp.stack(outs, axis=0)


if __name__ == "__main__":
    key = jax.random.PRNGKey(0)
    kx, kp = jax.random.split(key)
    x = jax.random.normal(kx, (B, S, D), jnp.float32)
    # mask: 1 = attend, 0 = masked; batch 1 has two padding positions.
    mask = jnp.ones((B, 1, S), jnp.float32)
    mask = mask.at[1, 0, 6:].set(0.0)
    params = init_params(kp)

    out = jax.block_until_ready(encoder_layer(x, mask, params))

    ref = reference(x, mask, params)
    assert out.shape == (B, S, D) and out.dtype == jnp.float32
    err = float(jnp.max(jnp.abs(out - ref)))
    assert jnp.allclose(out, ref, atol=1e-4, rtol=1e-4), err
    print("KERNEL_OK")
</pallas_src>

<mosaic_0001>
module attributes {stable_mosaic.version = 11 : i64} {
  func.func @encoder_layer_kernel(%arg0: memref<16x32xf32, #tpu.memory_space<vmem>>, %arg1: memref<16x16xf32, #tpu.memory_space<vmem>>, %arg2: memref<32x96xf32, #tpu.memory_space<vmem>>, %arg3: memref<4x8x32xf32, #tpu.memory_space<vmem>>, %arg4: memref<32x64xf32, #tpu.memory_space<vmem>>, %arg5: memref<64x32xf32, #tpu.memory_space<vmem>>, %arg6: memref<8x96xf32, #tpu.memory_space<vmem>>, %arg7: memref<16x32xf32, #tpu.memory_space<vmem>>) attributes {dimension_semantics = [], scalar_prefetch = 0 : i64, scratch_operands = 0 : i64, tpu.core_type = #tpu.core_type<tc>} {
    %c0 = arith.constant 0 : index
    %c0_0 = arith.constant 0 : index
    %0 = vector.load %arg0[%c0, %c0_0] : memref<16x32xf32, #tpu.memory_space<vmem>>, vector<16x32xf32>
    %c0_1 = arith.constant 0 : index
    %c0_2 = arith.constant 0 : index
    %1 = vector.load %arg6[%c0_1, %c0_2] : memref<8x96xf32, #tpu.memory_space<vmem>>, vector<8x96xf32>
    %2 = vector.extract_strided_slice %1 {offsets = [0, 0], sizes = [1, 32], strides = [1, 1]} : vector<8x96xf32> to vector<1x32xf32>
    %3 = vector.extract_strided_slice %1 {offsets = [1, 0], sizes = [1, 32], strides = [1, 1]} : vector<8x96xf32> to vector<1x32xf32>
    %4 = vector.extract_strided_slice %1 {offsets = [2, 0], sizes = [1, 32], strides = [1, 1]} : vector<8x96xf32> to vector<1x32xf32>
    %5 = vector.extract_strided_slice %1 {offsets = [3, 0], sizes = [1, 32], strides = [1, 1]} : vector<8x96xf32> to vector<1x32xf32>
    %6 = vector.extract_strided_slice %1 {offsets = [4, 0], sizes = [1, 96], strides = [1, 1]} : vector<8x96xf32> to vector<1x96xf32>
    %7 = vector.extract_strided_slice %1 {offsets = [5, 0], sizes = [1, 32], strides = [1, 1]} : vector<8x96xf32> to vector<1x32xf32>
    %8 = vector.extract_strided_slice %1 {offsets = [6, 0], sizes = [1, 64], strides = [1, 1]} : vector<8x96xf32> to vector<1x64xf32>
    %9 = vector.extract_strided_slice %1 {offsets = [7, 0], sizes = [1, 32], strides = [1, 1]} : vector<8x96xf32> to vector<1x32xf32>
    %c0_3 = arith.constant 0 : index
    %c0_4 = arith.constant 0 : index
    %10 = vector.load %arg1[%c0_3, %c0_4] : memref<16x16xf32, #tpu.memory_space<vmem>>, vector<16x16xf32>
    %cst = arith.constant dense<0.000000e+00> : vector<16xf32>
    %11 = vector.multi_reduction <add>, %0, %cst [1] : vector<16x32xf32> to vector<16xf32>
    %12 = vector.shape_cast %11 : vector<16xf32> to vector<16x1xf32>
    %cst_5 = arith.constant 3.200000e+01 : f32
    %13 = vector.broadcast %cst_5 : f32 to vector<16x1xf32>
    %14 = arith.divf %12, %13 : vector<16x1xf32>
    %15 = vector.broadcast %14 : vector<16x1xf32> to vector<16x32xf32>
    %16 = arith.subf %0, %15 : vector<16x32xf32>
    %17 = arith.mulf %16, %16 : vector<16x32xf32>
    %cst_6 = arith.constant dense<0.000000e+00> : vector<16xf32>
    %18 = vector.multi_reduction <add>, %17, %cst_6 [1] : vector<16x32xf32> to vector<16xf32>
    %19 = vector.shape_cast %18 : vector<16xf32> to vector<16x1xf32>
    %cst_7 = arith.constant 3.100000e+01 : f32
    %20 = vector.broadcast %cst_7 : f32 to vector<16x1xf32>
    %21 = arith.divf %19, %20 : vector<16x1xf32>
    %22 = math.sqrt %21 : vector<16x1xf32>
    %cst_8 = arith.constant 9.99999997E-7 : f32
    %23 = vector.broadcast %cst_8 : f32 to vector<16x1xf32>
    %24 = arith.addf %22, %23 : vector<16x1xf32>
    %25 = tpu.reciprocal %24 : vector<16x1xf32> -> vector<16x1xf32>
    %26 = vector.broadcast %14 : vector<16x1xf32> to vector<16x32xf32>
    %27 = arith.subf %0, %26 : vector<16x32xf32>
    %28 = vector.broadcast %2 : vector<1x32xf32> to vector<16x32xf32>
    %29 = arith.mulf %28, %27 : vector<16x32xf32>
    %30 = vector.broadcast %25 : vector<16x1xf32> to vector<16x32xf32>
    %31 = arith.mulf %29, %30 : vector<16x32xf32>
    %32 = vector.broadcast %3 : vector<1x32xf32> to vector<16x32xf32>
    %33 = arith.addf %31, %32 : vector<16x32xf32>
    %c0_9 = arith.constant 0 : index
    %c0_10 = arith.constant 0 : index
    %34 = vector.load %arg2[%c0_9, %c0_10] : memref<32x96xf32, #tpu.memory_space<vmem>>, vector<32x96xf32>
    %cst_11 = arith.constant dense<0.000000e+00> : vector<16x96xf32>
    %35 = tpu.matmul %33, %34, %cst_11 {dimension_numbers = #tpu.dot_dimension_numbers<[1], [0], [0], [1], [0, 0, 1, 1], [], []>} : vector<16x32xf32>, vector<32x96xf32>, vector<16x96xf32> -> vector<16x96xf32>
    %36 = vector.broadcast %6 : vector<1x96xf32> to vector<16x96xf32>
    %37 = arith.addf %35, %36 : vector<16x96xf32>
    %38 = vector.extract_strided_slice %37 {offsets = [0, 0], sizes = [16, 8], strides = [1, 1]} : vector<16x96xf32> to vector<16x8xf32>
    %39 = vector.extract_strided_slice %37 {offsets = [0, 32], sizes = [16, 8], strides = [1, 1]} : vector<16x96xf32> to vector<16x8xf32>
    %40 = tpu.transpose %39, [1, 0] : vector<16x8xf32> -> vector<8x16xf32>
    %cst_12 = arith.constant dense<0.000000e+00> : vector<16x16xf32>
    %41 = tpu.matmul %38, %40, %cst_12 {dimension_numbers = #tpu.dot_dimension_numbers<[1], [0], [0], [1], [0, 0, 1, 1], [], []>} : vector<16x8xf32>, vector<8x16xf32>, vector<16x16xf32> -> vector<16x16xf32>
    %42 = arith.addf %41, %10 : vector<16x16xf32>
    %43 = vector.extract_strided_slice %37 {offsets = [0, 8], sizes = [16, 8], strides = [1, 1]} : vector<16x96xf32> to vector<16x8xf32>
    %44 = vector.extract_strided_slice %37 {offsets = [0, 40], sizes = [16, 8], strides = [1, 1]} : vector<16x96xf32> to vector<16x8xf32>
    %45 = tpu.transpose %44, [1, 0] : vector<16x8xf32> -> vector<8x16xf32>
    %cst_13 = arith.constant dense<0.000000e+00> : vector<16x16xf32>
    %46 = tpu.matmul %43, %45, %cst_13 {dimension_numbers = #tpu.dot_dimension_numbers<[1], [0], [0], [1], [0, 0, 1, 1], [], []>} : vector<16x8xf32>, vector<8x16xf32>, vector<16x16xf32> -> vector<16x16xf32>
    %47 = arith.addf %46, %10 : vector<16x16xf32>
    %48 = vector.extract_strided_slice %37 {offsets = [0, 16], sizes = [16, 8], strides = [1, 1]} : vector<16x96xf32> to vector<16x8xf32>
    %49 = vector.extract_strided_slice %37 {offsets = [0, 48], sizes = [16, 8], strides = [1, 1]} : vector<16x96xf32> to vector<16x8xf32>
    %50 = tpu.transpose %49, [1, 0] : vector<16x8xf32> -> vector<8x16xf32>
    %cst_14 = arith.constant dense<0.000000e+00> : vector<16x16xf32>
    %51 = tpu.matmul %48, %50, %cst_14 {dimension_numbers = #tpu.dot_dimension_numbers<[1], [0], [0], [1], [0, 0, 1, 1], [], []>} : vector<16x8xf32>, vector<8x16xf32>, vector<16x16xf32> -> vector<16x16xf32>
    %52 = arith.addf %51, %10 : vector<16x16xf32>
    %53 = vector.extract_strided_slice %37 {offsets = [0, 24], sizes = [16, 8], strides = [1, 1]} : vector<16x96xf32> to vector<16x8xf32>
    %54 = vector.extract_strided_slice %37 {offsets = [0, 56], sizes = [16, 8], strides = [1, 1]} : vector<16x96xf32> to vector<16x8xf32>
    %55 = tpu.transpose %54, [1, 0] : vector<16x8xf32> -> vector<8x16xf32>
    %cst_15 = arith.constant dense<0.000000e+00> : vector<16x16xf32>
    %56 = tpu.matmul %53, %55, %cst_15 {dimension_numbers = #tpu.dot_dimension_numbers<[1], [0], [0], [1], [0, 0, 1, 1], [], []>} : vector<16x8xf32>, vector<8x16xf32>, vector<16x16xf32> -> vector<16x16xf32>
    %57 = arith.addf %56, %10 : vector<16x16xf32>
    %58 = tpu.concatenate %42, %47, %52, %57 in 0 : vector<16x16xf32>, vector<16x16xf32>, vector<16x16xf32>, vector<16x16xf32> -> vector<64x16xf32>
    %cst_16 = arith.constant dense<0xFF800000> : vector<64xf32>
    %59 = vector.multi_reduction <maximumf>, %58, %cst_16 [1] : vector<64x16xf32> to vector<64xf32>
    %60 = vector.shape_cast %59 : vector<64xf32> to vector<64x1xf32>
    %61 = vector.broadcast %60 : vector<64x1xf32> to vector<64x16xf32>
    %62 = arith.subf %58, %61 : vector<64x16xf32>
    %63 = math.exp %62 : vector<64x16xf32>
    %cst_17 = arith.constant dense<0.000000e+00> : vector<64xf32>
    %64 = vector.multi_reduction <add>, %63, %cst_17 [1] : vector<64x16xf32> to vector<64xf32>
    %65 = vector.shape_cast %64 : vector<64xf32> to vector<64x1xf32>
    %66 = tpu.reciprocal %65 : vector<64x1xf32> -> vector<64x1xf32>
    %67 = vector.broadcast %66 : vector<64x1xf32> to vector<64x16xf32>
    %68 = arith.mulf %63, %67 : vector<64x16xf32>
    %c0_18 = arith.constant 0 : index
    %c0_19 = arith.constant 0 : index
    %c0_20 = arith.constant 0 : index
    %69 = vector.load %arg3[%c0_18, %c0_19, %c0_20] : memref<4x8x32xf32, #tpu.memory_space<vmem>>, vector<4x8x32xf32>
    %70 = vector.extract_strided_slice %37 {offsets = [0, 64], sizes = [16, 8], strides = [1, 1]} : vector<16x96xf32> to vector<16x8xf32>
    %71 = vector.extract_strided_slice %68 {offsets = [0, 0], sizes = [16, 16], strides = [1, 1]} : vector<64x16xf32> to vector<16x16xf32>
    %cst_21 = arith.constant dense<0.000000e+00> : vector<16x8xf32>
    %72 = tpu.matmul %71, %70, %cst_21 {dimension_numbers = #tpu.dot_dimension_numbers<[1], [0], [0], [1], [0, 0, 1, 1], [], []>} : vector<16x16xf32>, vector<16x8xf32>, vector<16x8xf32> -> vector<16x8xf32>
    %73 = vector.extract_strided_slice %69 {offsets = [0, 0, 0], sizes = [1, 8, 32], strides = [1, 1, 1]} : vector<4x8x32xf32> to vector<1x8x32xf32>
    %74 = vector.shape_cast %73 : vector<1x8x32xf32> to vector<8x32xf32>
    %cst_22 = arith.constant dense<0.000000e+00> : vector<16x32xf32>
    %75 = tpu.matmul %72, %74, %cst_22 {dimension_numbers = #tpu.dot_dimension_numbers<[1], [0], [0], [1], [0, 0, 1, 1], [], []>} : vector<16x8xf32>, vector<8x32xf32>, vector<16x32xf32> -> vector<16x32xf32>
    %76 = vector.extract_strided_slice %37 {offsets = [0, 72], sizes = [16, 8], strides = [1, 1]} : vector<16x96xf32> to vector<16x8xf32>
    %77 = vector.extract_strided_slice %68 {offsets = [16, 0], sizes = [16, 16], strides = [1, 1]} : vector<64x16xf32> to vector<16x16xf32>
    %cst_23 = arith.constant dense<0.000000e+00> : vector<16x8xf32>
    %78 = tpu.matmul %77, %76, %cst_23 {dimension_numbers = #tpu.dot_dimension_numbers<[1], [0], [0], [1], [0, 0, 1, 1], [], []>} : vector<16x16xf32>, vector<16x8xf32>, vector<16x8xf32> -> vector<16x8xf32>
    %79 = vector.extract_strided_slice %69 {offsets = [1, 0, 0], sizes = [1, 8, 32], strides = [1, 1, 1]} : vector<4x8x32xf32> to vector<1x8x32xf32>
    %80 = vector.shape_cast %79 : vector<1x8x32xf32> to vector<8x32xf32>
    %cst_24 = arith.constant dense<0.000000e+00> : vector<16x32xf32>
    %81 = tpu.matmul %78, %80, %cst_24 {dimension_numbers = #tpu.dot_dimension_numbers<[1], [0], [0], [1], [0, 0, 1, 1], [], []>} : vector<16x8xf32>, vector<8x32xf32>, vector<16x32xf32> -> vector<16x32xf32>
    %82 = arith.addf %75, %81 : vector<16x32xf32>
    %83 = vector.extract_strided_slice %37 {offsets = [0, 80], sizes = [16, 8], strides = [1, 1]} : vector<16x96xf32> to vector<16x8xf32>
    %84 = vector.extract_strided_slice %68 {offsets = [32, 0], sizes = [16, 16], strides = [1, 1]} : vector<64x16xf32> to vector<16x16xf32>
    %cst_25 = arith.constant dense<0.000000e+00> : vector<16x8xf32>
    %85 = tpu.matmul %84, %83, %cst_25 {dimension_numbers = #tpu.dot_dimension_numbers<[1], [0], [0], [1], [0, 0, 1, 1], [], []>} : vector<16x16xf32>, vector<16x8xf32>, vector<16x8xf32> -> vector<16x8xf32>
    %86 = vector.extract_strided_slice %69 {offsets = [2, 0, 0], sizes = [1, 8, 32], strides = [1, 1, 1]} : vector<4x8x32xf32> to vector<1x8x32xf32>
    %87 = vector.shape_cast %86 : vector<1x8x32xf32> to vector<8x32xf32>
    %cst_26 = arith.constant dense<0.000000e+00> : vector<16x32xf32>
    %88 = tpu.matmul %85, %87, %cst_26 {dimension_numbers = #tpu.dot_dimension_numbers<[1], [0], [0], [1], [0, 0, 1, 1], [], []>} : vector<16x8xf32>, vector<8x32xf32>, vector<16x32xf32> -> vector<16x32xf32>
    %89 = arith.addf %82, %88 : vector<16x32xf32>
    %90 = vector.extract_strided_slice %37 {offsets = [0, 88], sizes = [16, 8], strides = [1, 1]} : vector<16x96xf32> to vector<16x8xf32>
    %91 = vector.extract_strided_slice %68 {offsets = [48, 0], sizes = [16, 16], strides = [1, 1]} : vector<64x16xf32> to vector<16x16xf32>
    %cst_27 = arith.constant dense<0.000000e+00> : vector<16x8xf32>
    %92 = tpu.matmul %91, %90, %cst_27 {dimension_numbers = #tpu.dot_dimension_numbers<[1], [0], [0], [1], [0, 0, 1, 1], [], []>} : vector<16x16xf32>, vector<16x8xf32>, vector<16x8xf32> -> vector<16x8xf32>
    %93 = vector.extract_strided_slice %69 {offsets = [3, 0, 0], sizes = [1, 8, 32], strides = [1, 1, 1]} : vector<4x8x32xf32> to vector<1x8x32xf32>
    %94 = vector.shape_cast %93 : vector<1x8x32xf32> to vector<8x32xf32>
    %cst_28 = arith.constant dense<0.000000e+00> : vector<16x32xf32>
    %95 = tpu.matmul %92, %94, %cst_28 {dimension_numbers = #tpu.dot_dimension_numbers<[1], [0], [0], [1], [0, 0, 1, 1], [], []>} : vector<16x8xf32>, vector<8x32xf32>, vector<16x32xf32> -> vector<16x32xf32>
    %96 = arith.addf %89, %95 : vector<16x32xf32>
    %97 = arith.addf %0, %96 : vector<16x32xf32>
    %98 = vector.broadcast %7 : vector<1x32xf32> to vector<16x32xf32>
    %99 = arith.addf %97, %98 : vector<16x32xf32>
    %cst_29 = arith.constant dense<0.000000e+00> : vector<16xf32>
    %100 = vector.multi_reduction <add>, %99, %cst_29 [1] : vector<16x32xf32> to vector<16xf32>
    %101 = vector.shape_cast %100 : vector<16xf32> to vector<16x1xf32>
    %cst_30 = arith.constant 3.200000e+01 : f32
    %102 = vector.broadcast %cst_30 : f32 to vector<16x1xf32>
    %103 = arith.divf %101, %102 : vector<16x1xf32>
    %104 = vector.broadcast %103 : vector<16x1xf32> to vector<16x32xf32>
    %105 = arith.subf %99, %104 : vector<16x32xf32>
    %106 = arith.mulf %105, %105 : vector<16x32xf32>
    %cst_31 = arith.constant dense<0.000000e+00> : vector<16xf32>
    %107 = vector.multi_reduction <add>, %106, %cst_31 [1] : vector<16x32xf32> to vector<16xf32>
    %108 = vector.shape_cast %107 : vector<16xf32> to vector<16x1xf32>
    %cst_32 = arith.constant 3.100000e+01 : f32
    %109 = vector.broadcast %cst_32 : f32 to vector<16x1xf32>
    %110 = arith.divf %108, %109 : vector<16x1xf32>
    %111 = math.sqrt %110 : vector<16x1xf32>
    %cst_33 = arith.constant 9.99999997E-7 : f32
    %112 = vector.broadcast %cst_33 : f32 to vector<16x1xf32>
    %113 = arith.addf %111, %112 : vector<16x1xf32>
    %114 = tpu.reciprocal %113 : vector<16x1xf32> -> vector<16x1xf32>
    %115 = vector.broadcast %103 : vector<16x1xf32> to vector<16x32xf32>
    %116 = arith.subf %99, %115 : vector<16x32xf32>
    %117 = vector.broadcast %4 : vector<1x32xf32> to vector<16x32xf32>
    %118 = arith.mulf %117, %116 : vector<16x32xf32>
    %119 = vector.broadcast %114 : vector<16x1xf32> to vector<16x32xf32>
    %120 = arith.mulf %118, %119 : vector<16x32xf32>
    %121 = vector.broadcast %5 : vector<1x32xf32> to vector<16x32xf32>
    %122 = arith.addf %120, %121 : vector<16x32xf32>
    %c0_34 = arith.constant 0 : index
    %c0_35 = arith.constant 0 : index
    %123 = vector.load %arg4[%c0_34, %c0_35] : memref<32x64xf32, #tpu.memory_space<vmem>>, vector<32x64xf32>
    %cst_36 = arith.constant dense<0.000000e+00> : vector<16x64xf32>
    %124 = tpu.matmul %122, %123, %cst_36 {dimension_numbers = #tpu.dot_dimension_numbers<[1], [0], [0], [1], [0, 0, 1, 1], [], []>} : vector<16x32xf32>, vector<32x64xf32>, vector<16x64xf32> -> vector<16x64xf32>
    %125 = vector.broadcast %8 : vector<1x64xf32> to vector<16x64xf32>
    %126 = arith.addf %124, %125 : vector<16x64xf32>
    %cst_37 = arith.constant 0.000000e+00 : f32
    %127 = vector.broadcast %cst_37 : f32 to vector<16x64xf32>
    %128 = arith.maximumf %126, %127 : vector<16x64xf32>
    %c0_38 = arith.constant 0 : index
    %c0_39 = arith.constant 0 : index
    %129 = vector.load %arg5[%c0_38, %c0_39] : memref<64x32xf32, #tpu.memory_space<vmem>>, vector<64x32xf32>
    %cst_40 = arith.constant dense<0.000000e+00> : vector<16x32xf32>
    %130 = tpu.matmul %128, %129, %cst_40 {dimension_numbers = #tpu.dot_dimension_numbers<[1], [0], [0], [1], [0, 0, 1, 1], [], []>} : vector<16x64xf32>, vector<64x32xf32>, vector<16x32xf32> -> vector<16x32xf32>
    %131 = vector.broadcast %9 : vector<1x32xf32> to vector<16x32xf32>
    %132 = arith.addf %130, %131 : vector<16x32xf32>
    %133 = arith.addf %99, %132 : vector<16x32xf32>
    %c0_41 = arith.constant 0 : index
    %c0_42 = arith.constant 0 : index
    %134 = vector.load %arg7[%c0_41, %c0_42] : memref<16x32xf32, #tpu.memory_space<vmem>>, vector<16x32xf32>
    tpu.vector_store %arg7[%c0_41, %c0_42], %133 {strides = array<i32>} : memref<16x32xf32, #tpu.memory_space<vmem>>, vector<16x32xf32>,
    return
  }
}

</mosaic_0001>

<llo_original>
// kernel: encoder_layer.1
$region0: #{encoder_layer.1}
  #allocation0 [shape = 'u32[]', space=smem, size = 0x4, offset = 0x4, fixed_abs, tag = 'smem constant byte address 0x4 - core index']
  #allocation1 [shape = 'u32[144,128]{1,0:T(1,128)}', space=vmem, size = 0x12000, scoped, tag = 'internal scratch']
  %s0 = inlined_call_operand.vmem [shape: f32[16,32], index: 0, kind: input, shape index: {}]
  %s1 = inlined_call_operand.vmem [shape: f32[16,16], index: 1, kind: input, shape index: {}]
  %s2 = inlined_call_operand.vmem [shape: f32[32,96], index: 2, kind: input, shape index: {}]
  %s3 = inlined_call_operand.vmem [shape: f32[4,8,32], index: 3, kind: input, shape index: {}]
  %s4 = inlined_call_operand.vmem [shape: f32[32,64], index: 4, kind: input, shape index: {}]
  %s5 = inlined_call_operand.vmem [shape: f32[64,32], index: 5, kind: input, shape index: {}]
  %s6 = inlined_call_operand.vmem [shape: f32[8,96], index: 6, kind: input, shape index: {}]
  %s7 = inlined_call_operand.hbm [shape: f32[16,32], index: 7, kind: output, shape index: {}]
  %s8 = sld [smem:[#allocation0]]
  $region38: #{encoder_layer.1} parent=0
    _
  %s10 = ssub.s32 1, %s8
  %s11 = scalar_select 0, %s10, %s8
  $region1: #{encoder_layer.1} parent=0
    #allocation2 [shape = 'u8[8192]{0}', space=vmem, size = 0x2000, scoped, tag = 'output window, operand 0, single buffered']
    #allocation3 [shape = 's32[1]{0}', space=sflag, size = 0x4, scoped, tag = 'scoped memory for encoder_layer.1']
    %12 = vsyncpa [#allocation3], 0
    // Predicated region
    $region2: #{encoder_layer.1} parent=1 // pred_check
      _
    $region3: #{encoder_layer.1} parent=1 // pred_check_branch
      %14 = sbr.rel (0) target = $region5
    $region4: #{encoder_layer.1} parent=1 // pred_region
      _
    $region5: #{encoder_layer.1} parent=1 // pred_fallthru
      _
    // Predicated region
    $region6: #{encoder_layer.1} parent=1 // pred_check
      _
    $region7: #{encoder_layer.1} parent=1 // pred_check_branch
      %16 = sbr.rel (0) target = $region9
    $region8: #{encoder_layer.1} parent=1 // pred_region
      _
    $region9: #{encoder_layer.1} parent=1 // pred_fallthru
      _
    // Predicated region
    $region10: #{encoder_layer.1} parent=1 // pred_check
      _
    $region11: #{encoder_layer.1} parent=1 // pred_check_branch
      %18 = sbr.rel (0) target = $region13
    $region12: #{encoder_layer.1} parent=1 // pred_region
      _
    $region13: #{encoder_layer.1} parent=1 // pred_fallthru
      _
    // Predicated region
    $region14: #{encoder_layer.1} parent=1 // pred_check
      _
    $region15: #{encoder_layer.1} parent=1 // pred_check_branch
      %20 = sbr.rel (0) target = $region17
    $region16: #{encoder_layer.1} parent=1 // pred_region
      _
    $region17: #{encoder_layer.1} parent=1 // pred_fallthru
      _
    // Predicated region
    $region18: #{encoder_layer.1} parent=1 // pred_check
      _
    $region19: #{encoder_layer.1} parent=1 // pred_check_branch
      %22 = sbr.rel (0) target = $region21
    $region20: #{encoder_layer.1} parent=1 // pred_region
      _
    $region21: #{encoder_layer.1} parent=1 // pred_fallthru
      _
    // Predicated region
    $region22: #{encoder_layer.1} parent=1 // pred_check
      _
    $region23: #{encoder_layer.1} parent=1 // pred_check_branch
      %24 = sbr.rel (0) target = $region25
    $region24: #{encoder_layer.1} parent=1 // pred_region
      _
    $region25: #{encoder_layer.1} parent=1 // pred_fallthru
      _
    // Predicated region
    $region26: #{encoder_layer.1} parent=1 // pred_check
      _
    $region27: #{encoder_layer.1} parent=1 // pred_check_branch
      %26 = sbr.rel (0) target = $region29
    $region28: #{encoder_layer.1} parent=1 // pred_region
      _
    $region29: #{encoder_layer.1} parent=1 // pred_fallthru
      _
    %v27 = vld [vmem:[%s0] sm:$0xff]
    %v28 = vld [vmem:[%s0 + $0x8] sm:$0xff]
    %v29 = vld [vmem:[%s6] sm:$0xff]
    %v30 = vld [vmem:[%s1] sm:$0xff]
    %v31 = vld [vmem:[%s1 + $0x8] sm:$0xff]
    %vm32 = vcmask 261120
    %v33 = vsel %vm32, %v27, 0.0
    %34 = vadd.xlane.f32.xlu0 %v33
    %v35 = vpop.xlane.xlu0 %34
    %v36 = vsel %vm32, %v28, 0.0
    %37 = vadd.xlane.f32.xlu0 %v36
    %v38 = vpop.xlane.xlu0 %37
    %v39 = vrcp.pop 32.0
    %v40 = vmul.f32 %v35, %v39
    %v41 = vmul.f32 %v38, %v39
    %v42 = vsub.f32 %v27, %v40
    %v43 = vsub.f32 %v28, %v41
    %v44 = vmul.f32 %v42, %v42
    %v45 = vmul.f32 %v43, %v43
    %v46 = vsel %vm32, %v44, 0.0
    %47 = vadd.xlane.f32.xlu0 %v46
    %v48 = vpop.xlane.xlu0 %47
    %v49 = vsel %vm32, %v45, 0.0
    %50 = vadd.xlane.f32.xlu0 %v49
    %v51 = vpop.xlane.xlu0 %50
    %v52 = vrcp.pop 31.0
    %v53 = vmul.f32 %v48, %v52
    %v54 = vmul.f32 %v51, %v52
    %v55 = vrsqrt.pop %v53
    %v56 = vmul.f32 %v53, %v55
    %vm57 = vcmp.eq.f32.partialorder %v53, inf
    %v58 = vsel %vm57, %v53, %v56
    %vm59 = vcmp.eq.f32.partialorder %v53, 0.0
    %v60 = vand.u32 %v53, 2147483648
    %v61 = vsel %vm59, %v60, %v58
    %v62 = vrsqrt.pop %v54
    %v63 = vmul.f32 %v54, %v62
    %vm64 = vcmp.eq.f32.partialorder %v54, inf
    %v65 = vsel %vm64, %v54, %v63
    %vm66 = vcmp.eq.f32.partialorder %v54, 0.0
    %v67 = vand.u32 %v54, 2147483648
    %v68 = vsel %vm66, %v67, %v65
    %v69 = vadd.f32 %v61, 1e-06
    %v70 = vadd.f32 %v68, 1e-06
    %v71 = vrcp.pop %v69
    %v72 = vrcp.pop %v70
    %v73 = vlaneseq
    %v74 = vshrl.u32 %v73, 7
    %v75 = vsub.s32 0, %v74
    %v76 = vrot.slane %v29, %v75
    %v77 = vmul.f32 %v76, %v42
    %v78 = vmul.f32 %v76, %v43
    %v79 = vmul.f32 %v77, %v71
    %v80 = vmul.f32 %v78, %v72
    %v81 = vlaneseq
    %v82 = vshrl.u32 %v81, 7
    %v83 = vsub.s32 1, %v82
    %v84 = vrot.slane %v29, %v83
    %v85 = vadd.f32 %v79, %v84
    %v86 = vadd.f32 %v80, %v84
    %v87 = vld [vmem:[%s2] sm:$0xff]
    %v88 = vld [vmem:[%s2 + $0x8] sm:$0xff]
    %v89 = vld [vmem:[%s2 + $0x10] sm:$0xff]
    %v90 = vld [vmem:[%s2 + $0x18] sm:$0xff]
    %v91 = vlaneseq
    %v92 = vshrl.u32 %v91, 7
    %v93 = vsub.s32 4, %v92
    %v94 = vrot.slane %v29, %v93
    %v96 = vsel %vm32, %v85, 0
    %v99 = vsel %vm32, %v86, 0
    %101 = vmatprep.subr.mxu0 0.0
    %102 = vmatpush1.msra.mxu0 0.0
    %103 = vmatprep.subr.mxu0 0.0
    %104 = vmatpush1.msra.mxu0 0.0
    %105 = vmatprep.subr.mxu0 0.0
    %106 = vmatpush1.msra.mxu0 0.0
    %107 = vmatprep.subr.mxu0 0.0
    %108 = vmatpush1.msra.mxu0 0.0
    %109 = vmatprep.subr.mxu0 0.0
    %110 = vmatpush1.msra.mxu0 0.0
    %111 = vmatprep.subr.mxu0 0.0
    %112 = vmatpush1.msra.mxu0 0.0
    %113 = vmatprep.subr.mxu0 0.0
    %114 = vmatpush1.msra.mxu0 0.0
    %115 = vmatprep.subr.mxu0 0.0
    %116 = vmatpush1.msra.mxu0 0.0
    %117 = vmatprep.subr.mxu0 0.0
    %118 = vmatpush1.msra.mxu0 0.0
    %119 = vmatprep.subr.mxu0 0.0
    %120 = vmatpush1.msra.mxu0 0.0
    %121 = vmatprep.subr.mxu0 0.0
    %122 = vmatpush1.msra.mxu0 0.0
    %123 = vmatprep.subr.mxu0 0.0
    %124 = vmatpush1.msra.mxu0 0.0
    %125 = vmatprep.subr.mxu0 0.0
    %126 = vmatpush1.msra.mxu0 %v90
    %127 = vmatprep.subr.mxu0 0.0
    %128 = vmatpush1.msra.mxu0 %v89
    %129 = vmatprep.subr.mxu0 0.0
    %130 = vmatpush1.msra.mxu0 %v88
    %131 = vmatprep.subr.mxu0 0.0
    %132 = vmatpush1.msra.mxu0 %v87
    %133 = vmatprep.subr.mxu0 0.0
    %134 = vmatpush2.msra.mxu0 0.0
    %135 = vmatprep.subr.mxu0 0.0
    %136 = vmatpush2.msra.mxu0 0.0
    %137 = vmatprep.subr.mxu0 0.0
    %138 = vmatpush2.msra.mxu0 0.0
    %139 = vmatprep.subr.mxu0 0.0
    %140 = vmatpush2.msra.mxu0 0.0
    %141 = vmatprep.subr.mxu0 0.0
    %142 = vmatpush2.msra.mxu0 0.0
    %143 = vmatprep.subr.mxu0 0.0
    %144 = vmatpush2.msra.mxu0 0.0
    %145 = vmatprep.subr.mxu0 0.0
    %146 = vmatpush2.msra.mxu0 0.0
    %147 = vmatprep.subr.mxu0 0.0
    %148 = vmatpush2.msra.mxu0 0.0
    %149 = vmatprep.subr.mxu0 0.0
    %150 = vmatpush2.msra.mxu0 0.0
    %151 = vmatprep.subr.mxu0 0.0
    %152 = vmatpush2.msra.mxu0 0.0
    %153 = vmatprep.subr.mxu0 0.0
    %154 = vmatpush2.msra.mxu0 0.0
    %155 = vmatprep.subr.mxu0 0.0
    %156 = vmatpush2.msra.mxu0 0.0
    %157 = vmatprep.subr.mxu0 0.0
    %158 = vmatpush2.msra.mxu0 0.0
    %159 = vmatprep.subr.mxu0 0.0
    %160 = vmatpush2.msra.mxu0 0.0
    %161 = vmatprep.subr.mxu0 0.0
    %162 = vmatpush2.msra.mxu0 0.0
    %163 = vmatprep.subr.mxu0 0.0
    %164 = vmatpush2.msra.mxu0 0.0
    %165 = vmatprep.mubr.f32.mxu0 0.0
    %166 = vmatmul.mubr.f32.gmra.mxu0 %v96
    %v167 = vpop.f32.mrf.mxu0
    %v168 = vadd.f32 %v94, %v167
    %v169 = vpop.f32.mrf.mxu0
    %170 = vmatprep.mubr.f32.mxu0 0.0
    %171 = vmatmul.mubr.f32.gmra.mxu0 %v99
    %v172 = vpop.f32.mrf.mxu0
    %v173 = vadd.f32 %v94, %v172
    %v174 = vpop.f32.mrf.mxu0
    %175 = vdwg.mxu0
    %178 = vrot.lane.b32.xlu0 %v168, 96
    %v179 = vpop.permute.xlu0 %178
    %180 = vrot.lane.b32.xlu0 %v173, 96
    %v181 = vpop.permute.xlu0 %180
    %vm182 = vcmask 64512
    %v183 = vsel %vm182, %v168, 0
    %v185 = vsel %vm182, %v173, 0
    %v187 = vsel %vm182, %v179, 0
    %v189 = vsel %vm182, %v181, 0
    %191 = vmatprep.subr.mxu0 0.0
    %192 = vmatpush1.xpose.msra.mxu0 0.0
    %193 = vmatprep.subr.mxu0 0.0
    %194 = vmatpush1.xpose.msra.mxu0 0.0
    %195 = vmatprep.subr.mxu0 0.0
    %196 = vmatpush1.xpose.msra.mxu0 0.0
    %197 = vmatprep.subr.mxu0 0.0
    %198 = vmatpush1.xpose.msra.mxu0 0.0
    %199 = vmatprep.subr.mxu0 0.0
    %200 = vmatpush1.xpose.msra.mxu0 0.0
    %201 = vmatprep.subr.mxu0 0.0
    %202 = vmatpush1.xpose.msra.mxu0 0.0
    %203 = vmatprep.subr.mxu0 0.0
    %204 = vmatpush1.xpose.msra.mxu0 0.0
    %205 = vmatprep.subr.mxu0 0.0
    %206 = vmatpush1.xpose.msra.mxu0 0.0
    %207 = vmatprep.subr.mxu0 0.0
    %208 = vmatpush1.xpose.msra.mxu0 0.0
    %209 = vmatprep.subr.mxu0 0.0
    %210 = vmatpush1.xpose.msra.mxu0 0.0
    %211 = vmatprep.subr.mxu0 0.0
    %212 = vmatpush1.xpose.msra.mxu0 0.0
    %213 = vmatprep.subr.mxu0 0.0
    %214 = vmatpush1.xpose.msra.mxu0 0.0
    %215 = vmatprep.subr.mxu0 0.0
    %216 = vmatpush1.xpose.msra.mxu0 0.0
    %217 = vmatprep.subr.mxu0 0.0
    %218 = vmatpush1.xpose.msra.mxu0 0.0
    %219 = vmatprep.subr.mxu0 0.0
    %220 = vmatpush1.xpose.msra.mxu0 %v189
    %221 = vmatprep.subr.mxu0 0.0
    %222 = vmatpush1.xpose.msra.mxu0 %v187
    %223 = vmatprep.subr.mxu0 0.0
    %224 = vmatpush2.xpose.msra.mxu0 0.0
    %225 = vmatprep.subr.mxu0 0.0
    %226 = vmatpush2.xpose.msra.mxu0 0.0
    %227 = vmatprep.subr.mxu0 0.0
    %228 = vmatpush2.xpose.msra.mxu0 0.0
    %229 = vmatprep.subr.mxu0 0.0
    %230 = vmatpush2.xpose.msra.mxu0 0.0
    %231 = vmatprep.subr.mxu0 0.0
    %232 = vmatpush2.xpose.msra.mxu0 0.0
    %233 = vmatprep.subr.mxu0 0.0
    %234 = vmatpush2.xpose.msra.mxu0 0.0
    %235 = vmatprep.subr.mxu0 0.0
    %236 = vmatpush2.xpose.msra.mxu0 0.0
    %237 = vmatprep.subr.mxu0 0.0
    %238 = vmatpush2.xpose.msra.mxu0 0.0
    %239 = vmatprep.subr.mxu0 0.0
    %240 = vmatpush2.xpose.msra.mxu0 0.0
    %241 = vmatprep.subr.mxu0 0.0
    %242 = vmatpush2.xpose.msra.mxu0 0.0
    %243 = vmatprep.subr.mxu0 0.0
    %244 = vmatpush2.xpose.msra.mxu0 0.0
    %245 = vmatprep.subr.mxu0 0.0
    %246 = vmatpush2.xpose.msra.mxu0 0.0
    %247 = vmatprep.subr.mxu0 0.0
    %248 = vmatpush2.xpose.msra.mxu0 0.0
    %249 = vmatprep.subr.mxu0 0.0
    %250 = vmatpush2.xpose.msra.mxu0 0.0
    %251 = vmatprep.subr.mxu0 0.0
    %252 = vmatpush2.xpose.msra.mxu0 0.0
    %253 = vmatprep.subr.mxu0 0.0
    %254 = vmatpush2.xpose.msra.mxu0 0.0
    %255 = vmatprep.mubr.f32.mxu0 0.0
    %256 = vmatmul.mubr.f32.gmra.mxu0 %v183
    %v257 = vpop.f32.mrf.mxu0
    %v258 = vadd.f32 %v30, %v257
    %v259 = vpop.f32.mrf.mxu0
    %260 = vmatprep.mubr.f32.mxu0 0.0
    %261 = vmatmul.mubr.f32.gmra.mxu0 %v185
    %v262 = vpop.f32.mrf.mxu0
    %v263 = vadd.f32 %v31, %v262
    %v264 = vpop.f32.mrf.mxu0
    %265 = vdwg.mxu0
    %266 = vrot.lane.b32.xlu0 %v168, 120
    %v267 = vpop.permute.xlu0 %266
    %268 = vrot.lane.b32.xlu0 %v173, 120
    %v269 = vpop.permute.xlu0 %268
    %270 = vrot.lane.b32.xlu0 %v168, 88
    %v271 = vpop.permute.xlu0 %270
    %272 = vrot.lane.b32.xlu0 %v173, 88
    %v273 = vpop.permute.xlu0 %272
    %v274 = vsel %vm182, %v267, 0
    %v276 = vsel %vm182, %v269, 0
    %v278 = vsel %vm182, %v271, 0
    %v280 = vsel %vm182, %v273, 0
    %282 = vmatprep.subr.mxu0 0.0
    %283 = vmatpush1.xpose.msra.mxu0 0.0
    %284 = vmatprep.subr.mxu0 0.0
    %285 = vmatpush1.xpose.msra.mxu0 0.0
    %286 = vmatprep.subr.mxu0 0.0
    %287 = vmatpush1.xpose.msra.mxu0 0.0
    %288 = vmatprep.subr.mxu0 0.0
    %289 = vmatpush1.xpose.msra.mxu0 0.0
    %290 = vmatprep.subr.mxu0 0.0
    %291 = vmatpush1.xpose.msra.mxu0 0.0
    %292 = vmatprep.subr.mxu0 0.0
    %293 = vmatpush1.xpose.msra.mxu0 0.0
    %294 = vmatprep.subr.mxu0 0.0
    %295 = vmatpush1.xpose.msra.mxu0 0.0
    %296 = vmatprep.subr.mxu0 0.0
    %297 = vmatpush1.xpose.msra.mxu0 0.0
    %298 = vmatprep.subr.mxu0 0.0
    %299 = vmatpush1.xpose.msra.mxu0 0.0
    %300 = vmatprep.subr.mxu0 0.0
    %301 = vmatpush1.xpose.msra.mxu0 0.0
    %302 = vmatprep.subr.mxu0 0.0
    %303 = vmatpush1.xpose.msra.mxu0 0.0
    %304 = vmatprep.subr.mxu0 0.0
    %305 = vmatpush1.xpose.msra.mxu0 0.0
    %306 = vmatprep.subr.mxu0 0.0
    %307 = vmatpush1.xpose.msra.mxu0 0.0
    %308 = vmatprep.subr.mxu0 0.0
    %309 = vmatpush1.xpose.msra.mxu0 0.0
    %310 = vmatprep.subr.mxu0 0.0
    %311 = vmatpush1.xpose.msra.mxu0 %v280
    %312 = vmatprep.subr.mxu0 0.0
    %313 = vmatpush1.xpose.msra.mxu0 %v278
    %314 = vmatprep.subr.mxu0 0.0
    %315 = vmatpush2.xpose.msra.mxu0 0.0
    %316 = vmatprep.subr.mxu0 0.0
    %317 = vmatpush2.xpose.msra.mxu0 0.0
    %318 = vmatprep.subr.mxu0 0.0
    %319 = vmatpush2.xpose.msra.mxu0 0.0
    %320 = vmatprep.subr.mxu0 0.0
    %321 = vmatpush2.xpose.msra.mxu0 0.0
    %322 = vmatprep.subr.mxu0 0.0
    %323 = vmatpush2.xpose.msra.mxu0 0.0
    %324 = vmatprep.subr.mxu0 0.0
    %325 = vmatpush2.xpose.msra.mxu0 0.0
    %326 = vmatprep.subr.mxu0 0.0
    %327 = vmatpush2.xpose.msra.mxu0 0.0
    %328 = vmatprep.subr.mxu0 0.0
    %329 = vmatpush2.xpose.msra.mxu0 0.0
    %330 = vmatprep.subr.mxu0 0.0
    %331 = vmatpush2.xpose.msra.mxu0 0.0
    %332 = vmatprep.subr.mxu0 0.0
    %333 = vmatpush2.xpose.msra.mxu0 0.0
    %334 = vmatprep.subr.mxu0 0.0
    %335 = vmatpush2.xpose.msra.mxu0 0.0
    %336 = vmatprep.subr.mxu0 0.0
    %337 = vmatpush2.xpose.msra.mxu0 0.0
    %338 = vmatprep.subr.mxu0 0.0
    %339 = vmatpush2.xpose.msra.mxu0 0.0
    %340 = vmatprep.subr.mxu0 0.0
    %341 = vmatpush2.xpose.msra.mxu0 0.0
    %342 = vmatprep.subr.mxu0 0.0
    %343 = vmatpush2.xpose.msra.mxu0 0.0
    %344 = vmatprep.subr.mxu0 0.0
    %345 = vmatpush2.xpose.msra.mxu0 0.0
    %346 = vmatprep.mubr.f32.mxu0 0.0
    %347 = vmatmul.mubr.f32.gmra.mxu0 %v274
    %v348 = vpop.f32.mrf.mxu0
    %v349 = vadd.f32 %v30, %v348
    %v350 = vpop.f32.mrf.mxu0
    %351 = vmatprep.mubr.f32.mxu0 0.0
    %352 = vmatmul.mubr.f32.gmra.mxu0 %v276
    %v353 = vpop.f32.mrf.mxu0
    %v354 = vadd.f32 %v31, %v353
    %v355 = vpop.f32.mrf.mxu0
    %356 = vdwg.mxu0
    %357 = vrot.lane.b32.xlu0 %v168, 112
    %v358 = vpop.permute.xlu0 %357
    %359 = vrot.lane.b32.xlu0 %v173, 112
    %v360 = vpop.permute.xlu0 %359
    %361 = vrot.lane.b32.xlu0 %v168, 80
    %v362 = vpop.permute.xlu0 %361
    %363 = vrot.lane.b32.xlu0 %v173, 80
    %v364 = vpop.permute.xlu0 %363
    %v365 = vsel %vm182, %v358, 0
    %v367 = vsel %vm182, %v360, 0
    %v369 = vsel %vm182, %v362, 0
    %v371 = vsel %vm182, %v364, 0
    %373 = vmatprep.subr.mxu0 0.0
    %374 = vmatpush1.xpose.msra.mxu0 0.0
    %375 = vmatprep.subr.mxu0 0.0
    %376 = vmatpush1.xpose.msra.mxu0 0.0
    %377 = vmatprep.subr.mxu0 0.0
    %378 = vmatpush1.xpose.msra.mxu0 0.0
    %379 = vmatprep.subr.mxu0 0.0
    %380 = vmatpush1.xpose.msra.mxu0 0.0
    %381 = vmatprep.subr.mxu0 0.0
    %382 = vmatpush1.xpose.msra.mxu0 0.0
    %383 = vmatprep.subr.mxu0 0.0
    %384 = vmatpush1.xpose.msra.mxu0 0.0
    %385 = vmatprep.subr.mxu0 0.0
    %386 = vmatpush1.xpose.msra.mxu0 0.0
    %387 = vmatprep.subr.mxu0 0.0
    %388 = vmatpush1.xpose.msra.mxu0 0.0
    %389 = vmatprep.subr.mxu0 0.0
    %390 = vmatpush1.xpose.msra.mxu0 0.0
    %391 = vmatprep.subr.mxu0 0.0
    %392 = vmatpush1.xpose.msra.mxu0 0.0
    %393 = vmatprep.subr.mxu0 0.0
    %394 = vmatpush1.xpose.msra.mxu0 0.0
    %395 = vmatprep.subr.mxu0 0.0
    %396 = vmatpush1.xpose.msra.mxu0 0.0
    %397 = vmatprep.subr.mxu0 0.0
    %398 = vmatpush1.xpose.msra.mxu0 0.0
    %399 = vmatprep.subr.mxu0 0.0
    %400 = vmatpush1.xpose.msra.mxu0 0.0
    %401 = vmatprep.subr.mxu0 0.0
    %402 = vmatpush1.xpose.msra.mxu0 %v371
    %403 = vmatprep.subr.mxu0 0.0
    %404 = vmatpush1.xpose.msra.mxu0 %v369
    %405 = vmatprep.subr.mxu0 0.0
    %406 = vmatpush2.xpose.msra.mxu0 0.0
    %407 = vmatprep.subr.mxu0 0.0
    %408 = vmatpush2.xpose.msra.mxu0 0.0
    %409 = vmatprep.subr.mxu0 0.0
    %410 = vmatpush2.xpose.msra.mxu0 0.0
    %411 = vmatprep.subr.mxu0 0.0
    %412 = vmatpush2.xpose.msra.mxu0 0.0
    %413 = vmatprep.subr.mxu0 0.0
    %414 = vmatpush2.xpose.msra.mxu0 0.0
    %415 = vmatprep.subr.mxu0 0.0
    %416 = vmatpush2.xpose.msra.mxu0 0.0
    %417 = vmatprep.subr.mxu0 0.0
    %418 = vmatpush2.xpose.msra.mxu0 0.0
    %419 = vmatprep.subr.mxu0 0.0
    %420 = vmatpush2.xpose.msra.mxu0 0.0
    %421 = vmatprep.subr.mxu0 0.0
    %422 = vmatpush2.xpose.msra.mxu0 0.0
    %423 = vmatprep.subr.mxu0 0.0
    %424 = vmatpush2.xpose.msra.mxu0 0.0
    %425 = vmatprep.subr.mxu0 0.0
    %426 = vmatpush2.xpose.msra.mxu0 0.0
    %427 = vmatprep.subr.mxu0 0.0
    %428 = vmatpush2.xpose.msra.mxu0 0.0
    %429 = vmatprep.subr.mxu0 0.0
    %430 = vmatpush2.xpose.msra.mxu0 0.0
    %431 = vmatprep.subr.mxu0 0.0
    %432 = vmatpush2.xpose.msra.mxu0 0.0
    %433 = vmatprep.subr.mxu0 0.0
    %434 = vmatpush2.xpose.msra.mxu0 0.0
    %435 = vmatprep.subr.mxu0 0.0
    %436 = vmatpush2.xpose.msra.mxu0 0.0
    %437 = vmatprep.mubr.f32.mxu0 0.0
    %438 = vmatmul.mubr.f32.gmra.mxu0 %v365
    %v439 = vpop.f32.mrf.mxu0
    %v440 = vadd.f32 %v30, %v439
    %v441 = vpop.f32.mrf.mxu0
    %442 = vmatprep.mubr.f32.mxu0 0.0
    %443 = vmatmul.mubr.f32.gmra.mxu0 %v367
    %v444 = vpop.f32.mrf.mxu0
    %v445 = vadd.f32 %v31, %v444
    %v446 = vpop.f32.mrf.mxu0
    %447 = vdwg.mxu0
    %448 = vrot.lane.b32.xlu0 %v168, 104
    %v449 = vpop.permute.xlu0 %448
    %450 = vrot.lane.b32.xlu0 %v173, 104
    %v451 = vpop.permute.xlu0 %450
    %452 = vrot.lane.b32.xlu0 %v168, 72
    %v453 = vpop.permute.xlu0 %452
    %454 = vrot.lane.b32.xlu0 %v173, 72
    %v455 = vpop.permute.xlu0 %454
    %v456 = vsel %vm182, %v449, 0
    %v458 = vsel %vm182, %v451, 0
    %v460 = vsel %vm182, %v453, 0
    %v462 = vsel %vm182, %v455, 0
    %464 = vmatprep.subr.mxu0 0.0
    %465 = vmatpush1.xpose.msra.mxu0 0.0
    %466 = vmatprep.subr.mxu0 0.0
    %467 = vmatpush1.xpose.msra.mxu0 0.0
    %468 = vmatprep.subr.mxu0 0.0
    %469 = vmatpush1.xpose.msra.mxu0 0.0
    %470 = vmatprep.subr.mxu0 0.0
    %471 = vmatpush1.xpose.msra.mxu0 0.0
    %472 = vmatprep.subr.mxu0 0.0
    %473 = vmatpush1.xpose.msra.mxu0 0.0
    %474 = vmatprep.subr.mxu0 0.0
    %475 = vmatpush1.xpose.msra.mxu0 0.0
    %476 = vmatprep.subr.mxu0 0.0
    %477 = vmatpush1.xpose.msra.mxu0 0.0
    %478 = vmatprep.subr.mxu0 0.0
    %479 = vmatpush1.xpose.msra.mxu0 0.0
    %480 = vmatprep.subr.mxu0 0.0
    %481 = vmatpush1.xpose.msra.mxu0 0.0
    %482 = vmatprep.subr.mxu0 0.0
    %483 = vmatpush1.xpose.msra.mxu0 0.0
    %484 = vmatprep.subr.mxu0 0.0
    %485 = vmatpush1.xpose.msra.mxu0 0.0
    %486 = vmatprep.subr.mxu0 0.0
    %487 = vmatpush1.xpose.msra.mxu0 0.0
    %488 = vmatprep.subr.mxu0 0.0
    %489 = vmatpush1.xpose.msra.mxu0 0.0
    %490 = vmatprep.subr.mxu0 0.0
    %491 = vmatpush1.xpose.msra.mxu0 0.0
    %492 = vmatprep.subr.mxu0 0.0
    %493 = vmatpush1.xpose.msra.mxu0 %v462
    %494 = vmatprep.subr.mxu0 0.0
    %495 = vmatpush1.xpose.msra.mxu0 %v460
    %496 = vmatprep.subr.mxu0 0.0
    %497 = vmatpush2.xpose.msra.mxu0 0.0
    %498 = vmatprep.subr.mxu0 0.0
    %499 = vmatpush2.xpose.msra.mxu0 0.0
    %500 = vmatprep.subr.mxu0 0.0
    %501 = vmatpush2.xpose.msra.mxu0 0.0
    %502 = vmatprep.subr.mxu0 0.0
    %503 = vmatpush2.xpose.msra.mxu0 0.0
    %504 = vmatprep.subr.mxu0 0.0
    %505 = vmatpush2.xpose.msra.mxu0 0.0
    %506 = vmatprep.subr.mxu0 0.0
    %507 = vmatpush2.xpose.msra.mxu0 0.0
    %508 = vmatprep.subr.mxu0 0.0
    %509 = vmatpush2.xpose.msra.mxu0 0.0
    %510 = vmatprep.subr.mxu0 0.0
    %511 = vmatpush2.xpose.msra.mxu0 0.0
    %512 = vmatprep.subr.mxu0 0.0
    %513 = vmatpush2.xpose.msra.mxu0 0.0
    %514 = vmatprep.subr.mxu0 0.0
    %515 = vmatpush2.xpose.msra.mxu0 0.0
    %516 = vmatprep.subr.mxu0 0.0
    %517 = vmatpush2.xpose.msra.mxu0 0.0
    %518 = vmatprep.subr.mxu0 0.0
    %519 = vmatpush2.xpose.msra.mxu0 0.0
    %520 = vmatprep.subr.mxu0 0.0
    %521 = vmatpush2.xpose.msra.mxu0 0.0
    %522 = vmatprep.subr.mxu0 0.0
    %523 = vmatpush2.xpose.msra.mxu0 0.0
    %524 = vmatprep.subr.mxu0 0.0
    %525 = vmatpush2.xpose.msra.mxu0 0.0
    %526 = vmatprep.subr.mxu0 0.0
    %527 = vmatpush2.xpose.msra.mxu0 0.0
    %528 = vmatprep.mubr.f32.mxu0 0.0
    %529 = vmatmul.mubr.f32.gmra.mxu0 %v456
    %v530 = vpop.f32.mrf.mxu0
    %v531 = vadd.f32 %v30, %v530
    %v532 = vpop.f32.mrf.mxu0
    %533 = vmatprep.mubr.f32.mxu0 0.0
    %534 = vmatmul.mubr.f32.gmra.mxu0 %v458
    %v535 = vpop.f32.mrf.mxu0
    %v536 = vadd.f32 %v31, %v535
    %v537 = vpop.f32.mrf.mxu0
    %538 = vdwg.mxu0
    %vm539 = vcmask 130048
    %v540 = vsel %vm539, %v258, -inf
    %541 = vmax.xlane.f32.xlu0 %v540
    %v542 = vpop.xlane.xlu0 %541
    %v543 = vsel %vm539, %v263, -inf
    %544 = vmax.xlane.f32.xlu0 %v543
    %v545 = vpop.xlane.xlu0 %544
    %v546 = vsel %vm539, %v349, -inf
    %547 = vmax.xlane.f32.xlu0 %v546
    %v548 = vpop.xlane.xlu0 %547
    %v549 = vsel %vm539, %v354, -inf
    %550 = vmax.xlane.f32.xlu0 %v549
    %v551 = vpop.xlane.xlu0 %550
    %v552 = vsel %vm539, %v440, -inf
    %553 = vmax.xlane.f32.xlu0 %v552
    %v554 = vpop.xlane.xlu0 %553
    %v555 = vsel %vm539, %v445, -inf
    %556 = vmax.xlane.f32.xlu0 %v555
    %v557 = vpop.xlane.xlu0 %556
    %v558 = vsel %vm539, %v531, -inf
    %559 = vmax.xlane.f32.xlu0 %v558
    %v560 = vpop.xlane.xlu0 %559
    %v561 = vsel %vm539, %v536, -inf
    %562 = vmax.xlane.f32.xlu0 %v561
    %v563 = vpop.xlane.xlu0 %562
    %v564 = vsub.f32 %v258, %v542
    %v565 = vsub.f32 %v263, %v545
    %v566 = vsub.f32 %v349, %v548
    %v567 = vsub.f32 %v354, %v551
    %v568 = vsub.f32 %v440, %v554
    %v569 = vsub.f32 %v445, %v557
    %v570 = vsub.f32 %v531, %v560
    %v571 = vsub.f32 %v536, %v563
    %v572 = vmul.f32 %v564, 1.442695
    %v573 = vpow.pop %v572
    %v574 = vmul.f32 %v565, 1.442695
    %v575 = vpow.pop %v574
    %v576 = vmul.f32 %v566, 1.442695
    %v577 = vpow.pop %v576
    %v578 = vmul.f32 %v567, 1.442695
    %v579 = vpow.pop %v578
    %v580 = vmul.f32 %v568, 1.442695
    %v581 = vpow.pop %v580
    %v582 = vmul.f32 %v569, 1.442695
    %v583 = vpow.pop %v582
    %v584 = vmul.f32 %v570, 1.442695
    %v585 = vpow.pop %v584
    %v586 = vmul.f32 %v571, 1.442695
    %v587 = vpow.pop %v586
    %v588 = vsel %vm539, %v573, 0.0
    %589 = vadd.xlane.f32.xlu0 %v588
    %v590 = vpop.xlane.xlu0 %589
    %v591 = vsel %vm539, %v575, 0.0
    %592 = vadd.xlane.f32.xlu0 %v591
    %v593 = vpop.xlane.xlu0 %592
    %v594 = vsel %vm539, %v577, 0.0
    %595 = vadd.xlane.f32.xlu0 %v594
    %v596 = vpop.xlane.xlu0 %595
    %v597 = vsel %vm539, %v579, 0.0
    %598 = vadd.xlane.f32.xlu0 %v597
    %v599 = vpop.xlane.xlu0 %598
    %v600 = vsel %vm539, %v581, 0.0
    %601 = vadd.xlane.f32.xlu0 %v600
    %v602 = vpop.xlane.xlu0 %601
    %v603 = vsel %vm539, %v583, 0.0
    %604 = vadd.xlane.f32.xlu0 %v603
    %v605 = vpop.xlane.xlu0 %604
    %v606 = vsel %vm539, %v585, 0.0
    %607 = vadd.xlane.f32.xlu0 %v606
    %v608 = vpop.xlane.xlu0 %607
    %v609 = vsel %vm539, %v587, 0.0
    %610 = vadd.xlane.f32.xlu0 %v609
    %v611 = vpop.xlane.xlu0 %610
    %v612 = vrcp.pop %v590
    %v613 = vrcp.pop %v593
    %v614 = vrcp.pop %v596
    %v615 = vrcp.pop %v599
    %v616 = vrcp.pop %v602
    %v617 = vrcp.pop %v605
    %v618 = vrcp.pop %v608
    %v619 = vrcp.pop %v611
    %v620 = vmul.f32 %v573, %v612
    %v621 = vmul.f32 %v575, %v613
    %v622 = vmul.f32 %v577, %v614
    %v623 = vmul.f32 %v579, %v615
    %v624 = vmul.f32 %v581, %v616
    %v625 = vmul.f32 %v583, %v617
    %v626 = vmul.f32 %v585, %v618
    %v627 = vmul.f32 %v587, %v619
    %v628 = vld [vmem:[%s3] sm:$0xff]
    %v629 = vld [vmem:[%s3 + $0x8] sm:$0xff]
    %v630 = vld [vmem:[%s3 + $0x10] sm:$0xff]
    %v631 = vld [vmem:[%s3 + $0x18] sm:$0xff]
    %632 = vrot.lane.b32.xlu0 %v168, 64
    %v633 = vpop.permute.xlu0 %632
    %634 = vrot.lane.b32.xlu0 %v173, 64
    %v635 = vpop.permute.xlu0 %634
    %v639 = vsel %vm539, %v620, 0
    %v642 = vsel %vm539, %v621, 0
    %644 = vmatprep.subr.mxu0 0.0
    %645 = vmatpush1.msra.mxu0 0.0
    %646 = vmatprep.subr.mxu0 0.0
    %647 = vmatpush1.msra.mxu0 0.0
    %648 = vmatprep.subr.mxu0 0.0
    %649 = vmatpush1.msra.mxu0 0.0
    %650 = vmatprep.subr.mxu0 0.0
    %651 = vmatpush1.msra.mxu0 0.0
    %652 = vmatprep.subr.mxu0 0.0
    %653 = vmatpush1.msra.mxu0 0.0
    %654 = vmatprep.subr.mxu0 0.0
    %655 = vmatpush1.msra.mxu0 0.0
    %656 = vmatprep.subr.mxu0 0.0
    %657 = vmatpush1.msra.mxu0 0.0
    %658 = vmatprep.subr.mxu0 0.0
    %659 = vmatpush1.msra.mxu0 0.0
    %660 = vmatprep.subr.mxu0 0.0
    %661 = vmatpush1.msra.mxu0 0.0
    %662 = vmatprep.subr.mxu0 0.0
    %663 = vmatpush1.msra.mxu0 0.0
    %664 = vmatprep.subr.mxu0 0.0
    %665 = vmatpush1.msra.mxu0 0.0
    %666 = vmatprep.subr.mxu0 0.0
    %667 = vmatpush1.msra.mxu0 0.0
    %668 = vmatprep.subr.mxu0 0.0
    %669 = vmatpush1.msra.mxu0 0.0
    %670 = vmatprep.subr.mxu0 0.0
    %671 = vmatpush1.msra.mxu0 0.0
    %672 = vmatprep.subr.mxu0 0.0
    %673 = vmatpush1.msra.mxu0 %v635
    %674 = vmatprep.subr.mxu0 0.0
    %675 = vmatpush1.msra.mxu0 %v633
    %676 = vmatprep.subr.mxu0 0.0
    %677 = vmatpush2.msra.mxu0 0.0
    %678 = vmatprep.subr.mxu0 0.0
    %679 = vmatpush2.msra.mxu0 0.0
    %680 = vmatprep.subr.mxu0 0.0
    %681 = vmatpush2.msra.mxu0 0.0
    %682 = vmatprep.subr.mxu0 0.0
    %683 = vmatpush2.msra.mxu0 0.0
    %684 = vmatprep.subr.mxu0 0.0
    %685 = vmatpush2.msra.mxu0 0.0
    %686 = vmatprep.subr.mxu0 0.0
    %687 = vmatpush2.msra.mxu0 0.0
    %688 = vmatprep.subr.mxu0 0.0
    %689 = vmatpush2.msra.mxu0 0.0
    %690 = vmatprep.subr.mxu0 0.0
    %691 = vmatpush2.msra.mxu0 0.0
    %692 = vmatprep.subr.mxu0 0.0
    %693 = vmatpush2.msra.mxu0 0.0
    %694 = vmatprep.subr.mxu0 0.0
    %695 = vmatpush2.msra.mxu0 0.0
    %696 = vmatprep.subr.mxu0 0.0
    %697 = vmatpush2.msra.mxu0 0.0
    %698 = vmatprep.subr.mxu0 0.0
    %699 = vmatpush2.msra.mxu0 0.0
    %700 = vmatprep.subr.mxu0 0.0
    %701 = vmatpush2.msra.mxu0 0.0
    %702 = vmatprep.subr.mxu0 0.0
    %703 = vmatpush2.msra.mxu0 0.0
    %704 = vmatprep.subr.mxu0 0.0
    %705 = vmatpush2.msra.mxu0 0.0
    %706 = vmatprep.subr.mxu0 0.0
    %707 = vmatpush2.msra.mxu0 0.0
    %708 = vmatprep.mubr.f32.mxu0 0.0
    %709 = vmatmul.mubr.f32.gmra.mxu0 %v639
    %v710 = vpop.f32.mrf.mxu0
    %v711 = vadd.f32 0.0, %v710
    %v712 = vpop.f32.mrf.mxu0
    %713 = vmatprep.mubr.f32.mxu0 0.0
    %714 = vmatmul.mubr.f32.gmra.mxu0 %v642
    %v715 = vpop.f32.mrf.mxu0
    %v716 = vadd.f32 0.0, %v715
    %v717 = vpop.f32.mrf.mxu0
    %718 = vdwg.mxu0
    %719 = vrot.lane.b32.xlu0 %v168, 56
    %v720 = vpop.permute.xlu0 %719
    %721 = vrot.lane.b32.xlu0 %v173, 56
    %v722 = vpop.permute.xlu0 %721
    %v726 = vsel %vm539, %v622, 0
    %v729 = vsel %vm539, %v623, 0
    %731 = vmatprep.subr.mxu0 0.0
    %732 = vmatpush1.msra.mxu0 0.0
    %733 = vmatprep.subr.mxu0 0.0
    %734 = vmatpush1.msra.mxu0 0.0
    %735 = vmatprep.subr.mxu0 0.0
    %736 = vmatpush1.msra.mxu0 0.0
    %737 = vmatprep.subr.mxu0 0.0
    %738 = vmatpush1.msra.mxu0 0.0
    %739 = vmatprep.subr.mxu0 0.0
    %740 = vmatpush1.msra.mxu0 0.0
    %741 = vmatprep.subr.mxu0 0.0
    %742 = vmatpush1.msra.mxu0 0.0
    %743 = vmatprep.subr.mxu0 0.0
    %744 = vmatpush1.msra.mxu0 0.0
    %745 = vmatprep.subr.mxu0 0.0
    %746 = vmatpush1.msra.mxu0 0.0
    %747 = vmatprep.subr.mxu0 0.0
    %748 = vmatpush1.msra.mxu0 0.0
    %749 = vmatprep.subr.mxu0 0.0
    %750 = vmatpush1.msra.mxu0 0.0
    %751 = vmatprep.subr.mxu0 0.0
    %752 = vmatpush1.msra.mxu0 0.0
    %753 = vmatprep.subr.mxu0 0.0
    %754 = vmatpush1.msra.mxu0 0.0
    %755 = vmatprep.subr.mxu0 0.0
    %756 = vmatpush1.msra.mxu0 0.0
    %757 = vmatprep.subr.mxu0 0.0
    %758 = vmatpush1.msra.mxu0 0.0
    %759 = vmatprep.subr.mxu0 0.0
    %760 = vmatpush1.msra.mxu0 %v722
    %761 = vmatprep.subr.mxu0 0.0
    %762 = vmatpush1.msra.mxu0 %v720
    %763 = vmatprep.subr.mxu0 0.0
    %764 = vmatpush2.msra.mxu0 0.0
    %765 = vmatprep.subr.mxu0 0.0
    %766 = vmatpush2.msra.mxu0 0.0
    %767 = vmatprep.subr.mxu0 0.0
    %768 = vmatpush2.msra.mxu0 0.0
    %769 = vmatprep.subr.mxu0 0.0
    %770 = vmatpush2.msra.mxu0 0.0
    %771 = vmatprep.subr.mxu0 0.0
    %772 = vmatpush2.msra.mxu0 0.0
    %773 = vmatprep.subr.mxu0 0.0
    %774 = vmatpush2.msra.mxu0 0.0
    %775 = vmatprep.subr.mxu0 0.0
    %776 = vmatpush2.msra.mxu0 0.0
    %777 = vmatprep.subr.mxu0 0.0
    %778 = vmatpush2.msra.mxu0 0.0
    %779 = vmatprep.subr.mxu0 0.0
    %780 = vmatpush2.msra.mxu0 0.0
    %781 = vmatprep.subr.mxu0 0.0
    %782 = vmatpush2.msra.mxu0 0.0
    %783 = vmatprep.subr.mxu0 0.0
    %784 = vmatpush2.msra.mxu0 0.0
    %785 = vmatprep.subr.mxu0 0.0
    %786 = vmatpush2.msra.mxu0 0.0
    %787 = vmatprep.subr.mxu0 0.0
    %788 = vmatpush2.msra.mxu0 0.0
    %789 = vmatprep.subr.mxu0 0.0
    %790 = vmatpush2.msra.mxu0 0.0
    %791 = vmatprep.subr.mxu0 0.0
    %792 = vmatpush2.msra.mxu0 0.0
    %793 = vmatprep.subr.mxu0 0.0
    %794 = vmatpush2.msra.mxu0 0.0
    %795 = vmatprep.mubr.f32.mxu0 0.0
    %796 = vmatmul.mubr.f32.gmra.mxu0 %v726
    %v797 = vpop.f32.mrf.mxu0
    %v798 = vadd.f32 0.0, %v797
    %v799 = vpop.f32.mrf.mxu0
    %800 = vmatprep.mubr.f32.mxu0 0.0
    %801 = vmatmul.mubr.f32.gmra.mxu0 %v729
    %v802 = vpop.f32.mrf.mxu0
    %v803 = vadd.f32 0.0, %v802
    %v804 = vpop.f32.mrf.mxu0
    %805 = vdwg.mxu0
    %v807 = vsel %vm182, %v798, 0
    %v810 = vsel %vm182, %v803, 0
    %812 = vmatprep.subr.mxu0 0.0
    %813 = vmatpush1.msra.mxu0 0.0
    %814 = vmatprep.subr.mxu0 0.0
    %815 = vmatpush1.msra.mxu0 0.0
    %816 = vmatprep.subr.mxu0 0.0
    %817 = vmatpush1.msra.mxu0 0.0
    %818 = vmatprep.subr.mxu0 0.0
    %819 = vmatpush1.msra.mxu0 0.0
    %820 = vmatprep.subr.mxu0 0.0
    %821 = vmatpush1.msra.mxu0 0.0
    %822 = vmatprep.subr.mxu0 0.0
    %823 = vmatpush1.msra.mxu0 0.0
    %824 = vmatprep.subr.mxu0 0.0
    %825 = vmatpush1.msra.mxu0 0.0
    %826 = vmatprep.subr.mxu0 0.0
    %827 = vmatpush1.msra.mxu0 0.0
    %828 = vmatprep.subr.mxu0 0.0
    %829 = vmatpush1.msra.mxu0 0.0
    %830 = vmatprep.subr.mxu0 0.0
    %831 = vmatpush1.msra.mxu0 0.0
    %832 = vmatprep.subr.mxu0 0.0
    %833 = vmatpush1.msra.mxu0 0.0
    %834 = vmatprep.subr.mxu0 0.0
    %835 = vmatpush1.msra.mxu0 0.0
    %836 = vmatprep.subr.mxu0 0.0
    %837 = vmatpush1.msra.mxu0 0.0
    %838 = vmatprep.subr.mxu0 0.0
    %839 = vmatpush1.msra.mxu0 0.0
    %840 = vmatprep.subr.mxu0 0.0
    %841 = vmatpush1.msra.mxu0 0.0
    %842 = vmatprep.subr.mxu0 0.0
    %843 = vmatpush1.msra.mxu0 %v629
    %844 = vmatprep.subr.mxu0 0.0
    %845 = vmatpush2.msra.mxu0 0.0
    %846 = vmatprep.subr.mxu0 0.0
    %847 = vmatpush2.msra.mxu0 0.0
    %848 = vmatprep.subr.mxu0 0.0
    %849 = vmatpush2.msra.mxu0 0.0
    %850 = vmatprep.subr.mxu0 0.0
    %851 = vmatpush2.msra.mxu0 0.0
    %852 = vmatprep.subr.mxu0 0.0
    %853 = vmatpush2.msra.mxu0 0.0
    %854 = vmatprep.subr.mxu0 0.0
    %855 = vmatpush2.msra.mxu0 0.0
    %856 = vmatprep.subr.mxu0 0.0
    %857 = vmatpush2.msra.mxu0 0.0
    %858 = vmatprep.subr.mxu0 0.0
    %859 = vmatpush2.msra.mxu0 0.0
    %860 = vmatprep.subr.mxu0 0.0
    %861 = vmatpush2.msra.mxu0 0.0
    %862 = vmatprep.subr.mxu0 0.0
    %863 = vmatpush2.msra.mxu0 0.0
    %864 = vmatprep.subr.mxu0 0.0
    %865 = vmatpush2.msra.mxu0 0.0
    %866 = vmatprep.subr.mxu0 0.0
    %867 = vmatpush2.msra.mxu0 0.0
    %868 = vmatprep.subr.mxu0 0.0
    %869 = vmatpush2.msra.mxu0 0.0
    %870 = vmatprep.subr.mxu0 0.0
    %871 = vmatpush2.msra.mxu0 0.0
    %872 = vmatprep.subr.mxu0 0.0
    %873 = vmatpush2.msra.mxu0 0.0
    %874 = vmatprep.subr.mxu0 0.0
    %875 = vmatpush2.msra.mxu0 0.0
    %876 = vmatprep.mubr.f32.mxu0 0.0
    %877 = vmatmul.mubr.f32.gmra.mxu0 %v807
    %v878 = vpop.f32.mrf.mxu0
    %v879 = vadd.f32 0.0, %v878
    %v880 = vpop.f32.mrf.mxu0
    %881 = vmatprep.mubr.f32.mxu0 0.0
    %882 = vmatmul.mubr.f32.gmra.mxu0 %v810
    %v883 = vpop.f32.mrf.mxu0
    %v884 = vadd.f32 0.0, %v883
    %v885 = vpop.f32.mrf.mxu0
    %886 = vdwg.mxu0
    %v888 = vsel %vm182, %v711, 0
    %v891 = vsel %vm182, %v716, 0
    %893 = vmatprep.subr.mxu0 0.0
    %894 = vmatpush1.msra.mxu0 0.0
    %895 = vmatprep.subr.mxu0 0.0
    %896 = vmatpush1.msra.mxu0 0.0
    %897 = vmatprep.subr.mxu0 0.0
    %898 = vmatpush1.msra.mxu0 0.0
    %899 = vmatprep.subr.mxu0 0.0
    %900 = vmatpush1.msra.mxu0 0.0
    %901 = vmatprep.subr.mxu0 0.0
    %902 = vmatpush1.msra.mxu0 0.0
    %903 = vmatprep.subr.mxu0 0.0
    %904 = vmatpush1.msra.mxu0 0.0
    %905 = vmatprep.subr.mxu0 0.0
    %906 = vmatpush1.msra.mxu0 0.0
    %907 = vmatprep.subr.mxu0 0.0
    %908 = vmatpush1.msra.mxu0 0.0
    %909 = vmatprep.subr.mxu0 0.0
    %910 = vmatpush1.msra.mxu0 0.0
    %911 = vmatprep.subr.mxu0 0.0
    %912 = vmatpush1.msra.mxu0 0.0
    %913 = vmatprep.subr.mxu0 0.0
    %914 = vmatpush1.msra.mxu0 0.0
    %915 = vmatprep.subr.mxu0 0.0
    %916 = vmatpush1.msra.mxu0 0.0
    %917 = vmatprep.subr.mxu0 0.0
    %918 = vmatpush1.msra.mxu0 0.0
    %919 = vmatprep.subr.mxu0 0.0
    %920 = vmatpush1.msra.mxu0 0.0
    %921 = vmatprep.subr.mxu0 0.0
    %922 = vmatpush1.msra.mxu0 0.0
    %923 = vmatprep.subr.mxu0 0.0
    %924 = vmatpush1.msra.mxu0 %v628
    %925 = vmatprep.subr.mxu0 0.0
    %926 = vmatpush2.msra.mxu0 0.0
    %927 = vmatprep.subr.mxu0 0.0
    %928 = vmatpush2.msra.mxu0 0.0
    %929 = vmatprep.subr.mxu0 0.0
    %930 = vmatpush2.msra.mxu0 0.0
    %931 = vmatprep.subr.mxu0 0.0
    %932 = vmatpush2.msra.mxu0 0.0
    %933 = vmatprep.subr.mxu0 0.0
    %934 = vmatpush2.msra.mxu0 0.0
    %935 = vmatprep.subr.mxu0 0.0
    %936 = vmatpush2.msra.mxu0 0.0
    %937 = vmatprep.subr.mxu0 0.0
    %938 = vmatpush2.msra.mxu0 0.0
    %939 = vmatprep.subr.mxu0 0.0
    %940 = vmatpush2.msra.mxu0 0.0
    %941 = vmatprep.subr.mxu0 0.0
    %942 = vmatpush2.msra.mxu0 0.0
    %943 = vmatprep.subr.mxu0 0.0
    %944 = vmatpush2.msra.mxu0 0.0
    %945 = vmatprep.subr.mxu0 0.0
    %946 = vmatpush2.msra.mxu0 0.0
    %947 = vmatprep.subr.mxu0 0.0
    %948 = vmatpush2.msra.mxu0 0.0
    %949 = vmatprep.subr.mxu0 0.0
    %950 = vmatpush2.msra.mxu0 0.0
    %951 = vmatprep.subr.mxu0 0.0
    %952 = vmatpush2.msra.mxu0 0.0
    %953 = vmatprep.subr.mxu0 0.0
    %954 = vmatpush2.msra.mxu0 0.0
    %955 = vmatprep.subr.mxu0 0.0
    %956 = vmatpush2.msra.mxu0 0.0
    %957 = vmatprep.mubr.f32.mxu0 0.0
    %958 = vmatmul.mubr.f32.gmra.mxu0 %v888
    %v959 = vpop.f32.mrf.mxu0
    %v960 = vadd.f32 %v879, %v959
    %v961 = vpop.f32.mrf.mxu0
    %962 = vmatprep.mubr.f32.mxu0 0.0
    %963 = vmatmul.mubr.f32.gmra.mxu0 %v891
    %v964 = vpop.f32.mrf.mxu0
    %v965 = vadd.f32 %v884, %v964
    %v966 = vpop.f32.mrf.mxu0
    %967 = vdwg.mxu0
    %968 = vrot.lane.b32.xlu0 %v168, 48
    %v969 = vpop.permute.xlu0 %968
    %970 = vrot.lane.b32.xlu0 %v173, 48
    %v971 = vpop.permute.xlu0 %970
    %v975 = vsel %vm539, %v624, 0
    %v978 = vsel %vm539, %v625, 0
    %980 = vmatprep.subr.mxu0 0.0
    %981 = vmatpush1.msra.mxu0 0.0
    %982 = vmatprep.subr.mxu0 0.0
    %983 = vmatpush1.msra.mxu0 0.0
    %984 = vmatprep.subr.mxu0 0.0
    %985 = vmatpush1.msra.mxu0 0.0
    %986 = vmatprep.subr.mxu0 0.0
    %987 = vmatpush1.msra.mxu0 0.0
    %988 = vmatprep.subr.mxu0 0.0
    %989 = vmatpush1.msra.mxu0 0.0
    %990 = vmatprep.subr.mxu0 0.0
    %991 = vmatpush1.msra.mxu0 0.0
    %992 = vmatprep.subr.mxu0 0.0
    %993 = vmatpush1.msra.mxu0 0.0
    %994 = vmatprep.subr.mxu0 0.0
    %995 = vmatpush1.msra.mxu0 0.0
    %996 = vmatprep.subr.mxu0 0.0
    %997 = vmatpush1.msra.mxu0 0.0
    %998 = vmatprep.subr.mxu0 0.0
    %999 = vmatpush1.msra.mxu0 0.0
    %1000 = vmatprep.subr.mxu0 0.0
    %1001 = vmatpush1.msra.mxu0 0.0
    %1002 = vmatprep.subr.mxu0 0.0
    %1003 = vmatpush1.msra.mxu0 0.0
    %1004 = vmatprep.subr.mxu0 0.0
    %1005 = vmatpush1.msra.mxu0 0.0
    %1006 = vmatprep.subr.mxu0 0.0
    %1007 = vmatpush1.msra.mxu0 0.0
    %1008 = vmatprep.subr.mxu0 0.0
    %1009 = vmatpush1.msra.mxu0 %v971
    %1010 = vmatprep.subr.mxu0 0.0
    %1011 = vmatpush1.msra.mxu0 %v969
    %1012 = vmatprep.subr.mxu0 0.0
    %1013 = vmatpush2.msra.mxu0 0.0
    %1014 = vmatprep.subr.mxu0 0.0
    %1015 = vmatpush2.msra.mxu0 0.0
    %1016 = vmatprep.subr.mxu0 0.0
    %1017 = vmatpush2.msra.mxu0 0.0
    %1018 = vmatprep.subr.mxu0 0.0
    %1019 = vmatpush2.msra.mxu0 0.0
    %1020 = vmatprep.subr.mxu0 0.0
    %1021 = vmatpush2.msra.mxu0 0.0
    %1022 = vmatprep.subr.mxu0 0.0
    %1023 = vmatpush2.msra.mxu0 0.0
    %1024 = vmatprep.subr.mxu0 0.0
    %1025 = vmatpush2.msra.mxu0 0.0
    %1026 = vmatprep.subr.mxu0 0.0
    %1027 = vmatpush2.msra.mxu0 0.0
    %1028 = vmatprep.subr.mxu0 0.0
    %1029 = vmatpush2.msra.mxu0 0.0
    %1030 = vmatprep.subr.mxu0 0.0
    %1031 = vmatpush2.msra.mxu0 0.0
    %1032 = vmatprep.subr.mxu0 0.0
    %1033 = vmatpush2.msra.mxu0 0.0
    %1034 = vmatprep.subr.mxu0 0.0
    %1035 = vmatpush2.msra.mxu0 0.0
    %1036 = vmatprep.subr.mxu0 0.0
    %1037 = vmatpush2.msra.mxu0 0.0
    %1038 = vmatprep.subr.mxu0 0.0
    %1039 = vmatpush2.msra.mxu0 0.0
    %1040 = vmatprep.subr.mxu0 0.0
    %1041 = vmatpush2.msra.mxu0 0.0
    %1042 = vmatprep.subr.mxu0 0.0
    %1043 = vmatpush2.msra.mxu0 0.0
    %1044 = vmatprep.mubr.f32.mxu0 0.0
    %1045 = vmatmul.mubr.f32.gmra.mxu0 %v975
    %v1046 = vpop.f32.mrf.mxu0
    %v1047 = vadd.f32 0.0, %v1046
    %v1048 = vpop.f32.mrf.mxu0
    %1049 = vmatprep.mubr.f32.mxu0 0.0
    %1050 = vmatmul.mubr.f32.gmra.mxu0 %v978
    %v1051 = vpop.f32.mrf.mxu0
    %v1052 = vadd.f32 0.0, %v1051
    %v1053 = vpop.f32.mrf.mxu0
    %1054 = vdwg.mxu0
    %v1056 = vsel %vm182, %v1047, 0
    %v1059 = vsel %vm182, %v1052, 0
    %1061 = vmatprep.subr.mxu0 0.0
    %1062 = vmatpush1.msra.mxu0 0.0
    %1063 = vmatprep.subr.mxu0 0.0
    %1064 = vmatpush1.msra.mxu0 0.0
    %1065 = vmatprep.subr.mxu0 0.0
    %1066 = vmatpush1.msra.mxu0 0.0
    %1067 = vmatprep.subr.mxu0 0.0
    %1068 = vmatpush1.msra.mxu0 0.0
    %1069 = vmatprep.subr.mxu0 0.0
    %1070 = vmatpush1.msra.mxu0 0.0
    %1071 = vmatprep.subr.mxu0 0.0
    %1072 = vmatpush1.msra.mxu0 0.0
    %1073 = vmatprep.subr.mxu0 0.0
    %1074 = vmatpush1.msra.mxu0 0.0
    %1075 = vmatprep.subr.mxu0 0.0
    %1076 = vmatpush1.msra.mxu0 0.0
    %1077 = vmatprep.subr.mxu0 0.0
    %1078 = vmatpush1.msra.mxu0 0.0
    %1079 = vmatprep.subr.mxu0 0.0
    %1080 = vmatpush1.msra.mxu0 0.0
    %1081 = vmatprep.subr.mxu0 0.0
    %1082 = vmatpush1.msra.mxu0 0.0
    %1083 = vmatprep.subr.mxu0 0.0
    %1084 = vmatpush1.msra.mxu0 0.0
    %1085 = vmatprep.subr.mxu0 0.0
    %1086 = vmatpush1.msra.mxu0 0.0
    %1087 = vmatprep.subr.mxu0 0.0
    %1088 = vmatpush1.msra.mxu0 0.0
    %1089 = vmatprep.subr.mxu0 0.0
    %1090 = vmatpush1.msra.mxu0 0.0
    %1091 = vmatprep.subr.mxu0 0.0
    %1092 = vmatpush1.msra.mxu0 %v630
    %1093 = vmatprep.subr.mxu0 0.0
    %1094 = vmatpush2.msra.mxu0 0.0
    %1095 = vmatprep.subr.mxu0 0.0
    %1096 = vmatpush2.msra.mxu0 0.0
    %1097 = vmatprep.subr.mxu0 0.0
    %1098 = vmatpush2.msra.mxu0 0.0
    %1099 = vmatprep.subr.mxu0 0.0
    %1100 = vmatpush2.msra.mxu0 0.0
    %1101 = vmatprep.subr.mxu0 0.0
    %1102 = vmatpush2.msra.mxu0 0.0
    %1103 = vmatprep.subr.mxu0 0.0
    %1104 = vmatpush2.msra.mxu0 0.0
    %1105 = vmatprep.subr.mxu0 0.0
    %1106 = vmatpush2.msra.mxu0 0.0
    %1107 = vmatprep.subr.mxu0 0.0
    %1108 = vmatpush2.msra.mxu0 0.0
    %1109 = vmatprep.subr.mxu0 0.0
    %1110 = vmatpush2.msra.mxu0 0.0
    %1111 = vmatprep.subr.mxu0 0.0
    %1112 = vmatpush2.msra.mxu0 0.0
    %1113 = vmatprep.subr.mxu0 0.0
    %1114 = vmatpush2.msra.mxu0 0.0
    %1115 = vmatprep.subr.mxu0 0.0
    %1116 = vmatpush2.msra.mxu0 0.0
    %1117 = vmatprep.subr.mxu0 0.0
    %1118 = vmatpush2.msra.mxu0 0.0
    %1119 = vmatprep.subr.mxu0 0.0
    %1120 = vmatpush2.msra.mxu0 0.0
    %1121 = vmatprep.subr.mxu0 0.0
    %1122 = vmatpush2.msra.mxu0 0.0
    %1123 = vmatprep.subr.mxu0 0.0
    %1124 = vmatpush2.msra.mxu0 0.0
    %1125 = vmatprep.mubr.f32.mxu0 0.0
    %1126 = vmatmul.mubr.f32.gmra.mxu0 %v1056
    %v1127 = vpop.f32.mrf.mxu0
    %v1128 = vadd.f32 0.0, %v1127
    %v1129 = vpop.f32.mrf.mxu0
    %1130 = vmatprep.mubr.f32.mxu0 0.0
    %1131 = vmatmul.mubr.f32.gmra.mxu0 %v1059
    %v1132 = vpop.f32.mrf.mxu0
    %v1133 = vadd.f32 0.0, %v1132
    %v1134 = vpop.f32.mrf.mxu0
    %1135 = vdwg.mxu0
    %v1136 = vadd.f32 %v960, %v1128
    %v1137 = vadd.f32 %v965, %v1133
    %1138 = vrot.lane.b32.xlu0 %v168, 40
    %v1139 = vpop.permute.xlu0 %1138
    %1140 = vrot.lane.b32.xlu0 %v173, 40
    %v1141 = vpop.permute.xlu0 %1140
    %v1145 = vsel %vm539, %v626, 0
    %v1148 = vsel %vm539, %v627, 0
    %1150 = vmatprep.subr.mxu0 0.0
    %1151 = vmatpush1.msra.mxu0 0.0
    %1152 = vmatprep.subr.mxu0 0.0
    %1153 = vmatpush1.msra.mxu0 0.0
    %1154 = vmatprep.subr.mxu0 0.0
    %1155 = vmatpush1.msra.mxu0 0.0
    %1156 = vmatprep.subr.mxu0 0.0
    %1157 = vmatpush1.msra.mxu0 0.0
    %1158 = vmatprep.subr.mxu0 0.0
    %1159 = vmatpush1.msra.mxu0 0.0
    %1160 = vmatprep.subr.mxu0 0.0
    %1161 = vmatpush1.msra.mxu0 0.0
    %1162 = vmatprep.subr.mxu0 0.0
    %1163 = vmatpush1.msra.mxu0 0.0
    %1164 = vmatprep.subr.mxu0 0.0
    %1165 = vmatpush1.msra.mxu0 0.0
    %1166 = vmatprep.subr.mxu0 0.0
    %1167 = vmatpush1.msra.mxu0 0.0
    %1168 = vmatprep.subr.mxu0 0.0
    %1169 = vmatpush1.msra.mxu0 0.0
    %1170 = vmatprep.subr.mxu0 0.0
    %1171 = vmatpush1.msra.mxu0 0.0
    %1172 = vmatprep.subr.mxu0 0.0
    %1173 = vmatpush1.msra.mxu0 0.0
    %1174 = vmatprep.subr.mxu0 0.0
    %1175 = vmatpush1.msra.mxu0 0.0
    %1176 = vmatprep.subr.mxu0 0.0
    %1177 = vmatpush1.msra.mxu0 0.0
    %1178 = vmatprep.subr.mxu0 0.0
    %1179 = vmatpush1.msra.mxu0 %v1141
    %1180 = vmatprep.subr.mxu0 0.0
    %1181 = vmatpush1.msra.mxu0 %v1139
    %1182 = vmatprep.subr.mxu0 0.0
    %1183 = vmatpush2.msra.mxu0 0.0
    %1184 = vmatprep.subr.mxu0 0.0
    %1185 = vmatpush2.msra.mxu0 0.0
    %1186 = vmatprep.subr.mxu0 0.0
    %1187 = vmatpush2.msra.mxu0 0.0
    %1188 = vmatprep.subr.mxu0 0.0
    %1189 = vmatpush2.msra.mxu0 0.0
    %1190 = vmatprep.subr.mxu0 0.0
    %1191 = vmatpush2.msra.mxu0 0.0
    %1192 = vmatprep.subr.mxu0 0.0
    %1193 = vmatpush2.msra.mxu0 0.0
    %1194 = vmatprep.subr.mxu0 0.0
    %1195 = vmatpush2.msra.mxu0 0.0
    %1196 = vmatprep.subr.mxu0 0.0
    %1197 = vmatpush2.msra.mxu0 0.0
    %1198 = vmatprep.subr.mxu0 0.0
    %1199 = vmatpush2.msra.mxu0 0.0
    %1200 = vmatprep.subr.mxu0 0.0
    %1201 = vmatpush2.msra.mxu0 0.0
    %1202 = vmatprep.subr.mxu0 0.0
    %1203 = vmatpush2.msra.mxu0 0.0
    %1204 = vmatprep.subr.mxu0 0.0
    %1205 = vmatpush2.msra.mxu0 0.0
    %1206 = vmatprep.subr.mxu0 0.0
    %1207 = vmatpush2.msra.mxu0 0.0
    %1208 = vmatprep.subr.mxu0 0.0
    %1209 = vmatpush2.msra.mxu0 0.0
    %1210 = vmatprep.subr.mxu0 0.0
    %1211 = vmatpush2.msra.mxu0 0.0
    %1212 = vmatprep.subr.mxu0 0.0
    %1213 = vmatpush2.msra.mxu0 0.0
    %1214 = vmatprep.mubr.f32.mxu0 0.0
    %1215 = vmatmul.mubr.f32.gmra.mxu0 %v1145
    %v1216 = vpop.f32.mrf.mxu0
    %v1217 = vadd.f32 0.0, %v1216
    %v1218 = vpop.f32.mrf.mxu0
    %1219 = vmatprep.mubr.f32.mxu0 0.0
    %1220 = vmatmul.mubr.f32.gmra.mxu0 %v1148
    %v1221 = vpop.f32.mrf.mxu0
    %v1222 = vadd.f32 0.0, %v1221
    %v1223 = vpop.f32.mrf.mxu0
    %1224 = vdwg.mxu0
    %v1226 = vsel %vm182, %v1217, 0
    %v1229 = vsel %vm182, %v1222, 0
    %1231 = vmatprep.subr.mxu0 0.0
    %1232 = vmatpush1.msra.mxu0 0.0
    %1233 = vmatprep.subr.mxu0 0.0
    %1234 = vmatpush1.msra.mxu0 0.0
    %1235 = vmatprep.subr.mxu0 0.0
    %1236 = vmatpush1.msra.mxu0 0.0
    %1237 = vmatprep.subr.mxu0 0.0
    %1238 = vmatpush1.msra.mxu0 0.0
    %1239 = vmatprep.subr.mxu0 0.0
    %1240 = vmatpush1.msra.mxu0 0.0
    %1241 = vmatprep.subr.mxu0 0.0
    %1242 = vmatpush1.msra.mxu0 0.0
    %1243 = vmatprep.subr.mxu0 0.0
    %1244 = vmatpush1.msra.mxu0 0.0
    %1245 = vmatprep.subr.mxu0 0.0
    %1246 = vmatpush1.msra.mxu0 0.0
    %1247 = vmatprep.subr.mxu0 0.0
    %1248 = vmatpush1.msra.mxu0 0.0
    %1249 = vmatprep.subr.mxu0 0.0
    %1250 = vmatpush1.msra.mxu0 0.0
    %1251 = vmatprep.subr.mxu0 0.0
    %1252 = vmatpush1.msra.mxu0 0.0
    %1253 = vmatprep.subr.mxu0 0.0
    %1254 = vmatpush1.msra.mxu0 0.0
    %1255 = vmatprep.subr.mxu0 0.0
    %1256 = vmatpush1.msra.mxu0 0.0
    %1257 = vmatprep.subr.mxu0 0.0
    %1258 = vmatpush1.msra.mxu0 0.0
    %1259 = vmatprep.subr.mxu0 0.0
    %1260 = vmatpush1.msra.mxu0 0.0
    %1261 = vmatprep.subr.mxu0 0.0
    %1262 = vmatpush1.msra.mxu0 %v631
    %1263 = vmatprep.subr.mxu0 0.0
    %1264 = vmatpush2.msra.mxu0 0.0
    %1265 = vmatprep.subr.mxu0 0.0
    %1266 = vmatpush2.msra.mxu0 0.0
    %1267 = vmatprep.subr.mxu0 0.0
    %1268 = vmatpush2.msra.mxu0 0.0
    %1269 = vmatprep.subr.mxu0 0.0
    %1270 = vmatpush2.msra.mxu0 0.0
    %1271 = vmatprep.subr.mxu0 0.0
    %1272 = vmatpush2.msra.mxu0 0.0
    %1273 = vmatprep.subr.mxu0 0.0
    %1274 = vmatpush2.msra.mxu0 0.0
    %1275 = vmatprep.subr.mxu0 0.0
    %1276 = vmatpush2.msra.mxu0 0.0
    %1277 = vmatprep.subr.mxu0 0.0
    %1278 = vmatpush2.msra.mxu0 0.0
    %1279 = vmatprep.subr.mxu0 0.0
    %1280 = vmatpush2.msra.mxu0 0.0
    %1281 = vmatprep.subr.mxu0 0.0
    %1282 = vmatpush2.msra.mxu0 0.0
    %1283 = vmatprep.subr.mxu0 0.0
    %1284 = vmatpush2.msra.mxu0 0.0
    %1285 = vmatprep.subr.mxu0 0.0
    %1286 = vmatpush2.msra.mxu0 0.0
    %1287 = vmatprep.subr.mxu0 0.0
    %1288 = vmatpush2.msra.mxu0 0.0
    %1289 = vmatprep.subr.mxu0 0.0
    %1290 = vmatpush2.msra.mxu0 0.0
    %1291 = vmatprep.subr.mxu0 0.0
    %1292 = vmatpush2.msra.mxu0 0.0
    %1293 = vmatprep.subr.mxu0 0.0
    %1294 = vmatpush2.msra.mxu0 0.0
    %1295 = vmatprep.mubr.f32.mxu0 0.0
    %1296 = vmatmul.mubr.f32.gmra.mxu0 %v1226
    %v1297 = vpop.f32.mrf.mxu0
    %v1298 = vadd.f32 0.0, %v1297
    %v1299 = vpop.f32.mrf.mxu0
    %1300 = vmatprep.mubr.f32.mxu0 0.0
    %1301 = vmatmul.mubr.f32.gmra.mxu0 %v1229
    %v1302 = vpop.f32.mrf.mxu0
    %v1303 = vadd.f32 0.0, %v1302
    %v1304 = vpop.f32.mrf.mxu0
    %1305 = vdwg.mxu0
    %v1306 = vadd.f32 %v1136, %v1298
    %v1307 = vadd.f32 %v1137, %v1303
    %v1308 = vadd.f32 %v27, %v1306
    %v1309 = vadd.f32 %v28, %v1307
    %v1310 = vlaneseq
    %v1311 = vshrl.u32 %v1310, 7
    %v1312 = vsub.s32 5, %v1311
    %v1313 = vrot.slane %v29, %v1312
    %v1314 = vadd.f32 %v1308, %v1313
    %v1315 = vadd.f32 %v1309, %v1313
    %v1316 = vsel %vm32, %v1314, 0.0
    %1317 = vadd.xlane.f32.xlu0 %v1316
    %v1318 = vpop.xlane.xlu0 %1317
    %v1319 = vsel %vm32, %v1315, 0.0
    %1320 = vadd.xlane.f32.xlu0 %v1319
    %v1321 = vpop.xlane.xlu0 %1320
    %v1322 = vmul.f32 %v1318, %v39
    %v1323 = vmul.f32 %v1321, %v39
    %v1324 = vsub.f32 %v1314, %v1322
    %v1325 = vsub.f32 %v1315, %v1323
    %v1326 = vmul.f32 %v1324, %v1324
    %v1327 = vmul.f32 %v1325, %v1325
    %v1328 = vsel %vm32, %v1326, 0.0
    %1329 = vadd.xlane.f32.xlu0 %v1328
    %v1330 = vpop.xlane.xlu0 %1329
    %v1331 = vsel %vm32, %v1327, 0.0
    %1332 = vadd.xlane.f32.xlu0 %v1331
    %v1333 = vpop.xlane.xlu0 %1332
    %v1334 = vmul.f32 %v1330, %v52
    %v1335 = vmul.f32 %v1333, %v52
    %v1336 = vrsqrt.pop %v1334
    %v1337 = vmul.f32 %v1334, %v1336
    %vm1338 = vcmp.eq.f32.partialorder %v1334, inf
    %v1339 = vsel %vm1338, %v1334, %v1337
    %vm1340 = vcmp.eq.f32.partialorder %v1334, 0.0
    %v1341 = vand.u32 %v1334, 2147483648
    %v1342 = vsel %vm1340, %v1341, %v1339
    %v1343 = vrsqrt.pop %v1335
    %v1344 = vmul.f32 %v1335, %v1343
    %vm1345 = vcmp.eq.f32.partialorder %v1335, inf
    %v1346 = vsel %vm1345, %v1335, %v1344
    %vm1347 = vcmp.eq.f32.partialorder %v1335, 0.0
    %v1348 = vand.u32 %v1335, 2147483648
    %v1349 = vsel %vm1347, %v1348, %v1346
    %v1350 = vadd.f32 %v1342, 1e-06
    %v1351 = vadd.f32 %v1349, 1e-06
    %v1352 = vrcp.pop %v1350
    %v1353 = vrcp.pop %v1351
    %v1354 = vlaneseq
    %v1355 = vshrl.u32 %v1354, 7
    %v1356 = vsub.s32 2, %v1355
    %v1357 = vrot.slane %v29, %v1356
    %v1358 = vmul.f32 %v1357, %v1324
    %v1359 = vmul.f32 %v1357, %v1325
    %v1360 = vmul.f32 %v1358, %v1352
    %v1361 = vmul.f32 %v1359, %v1353
    %v1362 = vlaneseq
    %v1363 = vshrl.u32 %v1362, 7
    %v1364 = vsub.s32 3, %v1363
    %v1365 = vrot.slane %v29, %v1364
    %v1366 = vadd.f32 %v1360, %v1365
    %v1367 = vadd.f32 %v1361, %v1365
    %v1368 = vld [vmem:[%s4] sm:$0xff]
    %v1369 = vld [vmem:[%s4 + $0x8] sm:$0xff]
    %v1370 = vld [vmem:[%s4 + $0x10] sm:$0xff]
    %v1371 = vld [vmem:[%s4 + $0x18] sm:$0xff]
    %v1372 = vlaneseq
    %v1373 = vshrl.u32 %v1372, 7
    %v1374 = vsub.s32 6, %v1373
    %v1375 = vrot.slane %v29, %v1374
    %v1377 = vsel %vm32, %v1366, 0
    %v1380 = vsel %vm32, %v1367, 0
    %1382 = vmatprep.subr.mxu0 0.0
    %1383 = vmatpush1.msra.mxu0 0.0
    %1384 = vmatprep.subr.mxu0 0.0
    %1385 = vmatpush1.msra.mxu0 0.0
    %1386 = vmatprep.subr.mxu0 0.0
    %1387 = vmatpush1.msra.mxu0 0.0
    %1388 = vmatprep.subr.mxu0 0.0
    %1389 = vmatpush1.msra.mxu0 0.0
    %1390 = vmatprep.subr.mxu0 0.0
    %1391 = vmatpush1.msra.mxu0 0.0
    %1392 = vmatprep.subr.mxu0 0.0
    %1393 = vmatpush1.msra.mxu0 0.0
    %1394 = vmatprep.subr.mxu0 0.0
    %1395 = vmatpush1.msra.mxu0 0.0
    %1396 = vmatprep.subr.mxu0 0.0
    %1397 = vmatpush1.msra.mxu0 0.0
    %1398 = vmatprep.subr.mxu0 0.0
    %1399 = vmatpush1.msra.mxu0 0.0
    %1400 = vmatprep.subr.mxu0 0.0
    %1401 = vmatpush1.msra.mxu0 0.0
    %1402 = vmatprep.subr.mxu0 0.0
    %1403 = vmatpush1.msra.mxu0 0.0
    %1404 = vmatprep.subr.mxu0 0.0
    %1405 = vmatpush1.msra.mxu0 0.0
    %1406 = vmatprep.subr.mxu0 0.0
    %1407 = vmatpush1.msra.mxu0 %v1371
    %1408 = vmatprep.subr.mxu0 0.0
    %1409 = vmatpush1.msra.mxu0 %v1370
    %1410 = vmatprep.subr.mxu0 0.0
    %1411 = vmatpush1.msra.mxu0 %v1369
    %1412 = vmatprep.subr.mxu0 0.0
    %1413 = vmatpush1.msra.mxu0 %v1368
    %1414 = vmatprep.subr.mxu0 0.0
    %1415 = vmatpush2.msra.mxu0 0.0
    %1416 = vmatprep.subr.mxu0 0.0
    %1417 = vmatpush2.msra.mxu0 0.0
    %1418 = vmatprep.subr.mxu0 0.0
    %1419 = vmatpush2.msra.mxu0 0.0
    %1420 = vmatprep.subr.mxu0 0.0
    %1421 = vmatpush2.msra.mxu0 0.0
    %1422 = vmatprep.subr.mxu0 0.0
    %1423 = vmatpush2.msra.mxu0 0.0
    %1424 = vmatprep.subr.mxu0 0.0
    %1425 = vmatpush2.msra.mxu0 0.0
    %1426 = vmatprep.subr.mxu0 0.0
    %1427 = vmatpush2.msra.mxu0 0.0
    %1428 = vmatprep.subr.mxu0 0.0
    %1429 = vmatpush2.msra.mxu0 0.0
    %1430 = vmatprep.subr.mxu0 0.0
    %1431 = vmatpush2.msra.mxu0 0.0
    %1432 = vmatprep.subr.mxu0 0.0
    %1433 = vmatpush2.msra.mxu0 0.0
    %1434 = vmatprep.subr.mxu0 0.0
    %1435 = vmatpush2.msra.mxu0 0.0
    %1436 = vmatprep.subr.mxu0 0.0
    %1437 = vmatpush2.msra.mxu0 0.0
    %1438 = vmatprep.subr.mxu0 0.0
    %1439 = vmatpush2.msra.mxu0 0.0
    %1440 = vmatprep.subr.mxu0 0.0
    %1441 = vmatpush2.msra.mxu0 0.0
    %1442 = vmatprep.subr.mxu0 0.0
    %1443 = vmatpush2.msra.mxu0 0.0
    %1444 = vmatprep.subr.mxu0 0.0
    %1445 = vmatpush2.msra.mxu0 0.0
    %1446 = vmatprep.mubr.f32.mxu0 0.0
    %1447 = vmatmul.mubr.f32.gmra.mxu0 %v1377
    %v1448 = vpop.f32.mrf.mxu0
    %v1449 = vadd.f32 %v1375, %v1448
    %v1450 = vpop.f32.mrf.mxu0
    %1451 = vmatprep.mubr.f32.mxu0 0.0
    %1452 = vmatmul.mubr.f32.gmra.mxu0 %v1380
    %v1453 = vpop.f32.mrf.mxu0
    %v1454 = vadd.f32 %v1375, %v1453
    %v1455 = vpop.f32.mrf.mxu0
    %1456 = vdwg.mxu0
    %v1457 = vmax.f32 %v1449, 0.0
    %v1458 = vmax.f32 %v1454, 0.0
    %v1459 = vld [vmem:[%s5] sm:$0xff]
    %v1460 = vld [vmem:[%s5 + $0x8] sm:$0xff]
    %v1461 = vld [vmem:[%s5 + $0x10] sm:$0xff]
    %v1462 = vld [vmem:[%s5 + $0x18] sm:$0xff]
    %v1463 = vld [vmem:[%s5 + $0x20] sm:$0xff]
    %v1464 = vld [vmem:[%s5 + $0x28] sm:$0xff]
    %v1465 = vld [vmem:[%s5 + $0x30] sm:$0xff]
    %v1466 = vld [vmem:[%s5 + $0x38] sm:$0xff]
    %v1467 = vlaneseq
    %v1468 = vshrl.u32 %v1467, 7
    %v1469 = vsub.s32 7, %v1468
    %v1470 = vrot.slane %v29, %v1469
    %vm1471 = vcmask 523264
    %v1473 = vsel %vm1471, %v1457, 0
    %v1476 = vsel %vm1471, %v1458, 0
    %1478 = vmatprep.subr.mxu0 0.0
    %1479 = vmatpush1.msra.mxu0 0.0
    %1480 = vmatprep.subr.mxu0 0.0
    %1481 = vmatpush1.msra.mxu0 0.0
    %1482 = vmatprep.subr.mxu0 0.0
    %1483 = vmatpush1.msra.mxu0 0.0
    %1484 = vmatprep.subr.mxu0 0.0
    %1485 = vmatpush1.msra.mxu0 0.0
    %1486 = vmatprep.subr.mxu0 0.0
    %1487 = vmatpush1.msra.mxu0 0.0
    %1488 = vmatprep.subr.mxu0 0.0
    %1489 = vmatpush1.msra.mxu0 0.0
    %1490 = vmatprep.subr.mxu0 0.0
    %1491 = vmatpush1.msra.mxu0 0.0
    %1492 = vmatprep.subr.mxu0 0.0
    %1493 = vmatpush1.msra.mxu0 0.0
    %1494 = vmatprep.subr.mxu0 0.0
    %1495 = vmatpush1.msra.mxu0 %v1466
    %1496 = vmatprep.subr.mxu0 0.0
    %1497 = vmatpush1.msra.mxu0 %v1465
    %1498 = vmatprep.subr.mxu0 0.0
    %1499 = vmatpush1.msra.mxu0 %v1464
    %1500 = vmatprep.subr.mxu0 0.0
    %1501 = vmatpush1.msra.mxu0 %v1463
    %1502 = vmatprep.subr.mxu0 0.0
    %1503 = vmatpush1.msra.mxu0 %v1462
    %1504 = vmatprep.subr.mxu0 0.0
    %1505 = vmatpush1.msra.mxu0 %v1461
    %1506 = vmatprep.subr.mxu0 0.0
    %1507 = vmatpush1.msra.mxu0 %v1460
    %1508 = vmatprep.subr.mxu0 0.0
    %1509 = vmatpush1.msra.mxu0 %v1459
    %1510 = vmatprep.subr.mxu0 0.0
    %1511 = vmatpush2.msra.mxu0 0.0
    %1512 = vmatprep.subr.mxu0 0.0
    %1513 = vmatpush2.msra.mxu0 0.0
    %1514 = vmatprep.subr.mxu0 0.0
    %1515 = vmatpush2.msra.mxu0 0.0
    %1516 = vmatprep.subr.mxu0 0.0
    %1517 = vmatpush2.msra.mxu0 0.0
    %1518 = vmatprep.subr.mxu0 0.0
    %1519 = vmatpush2.msra.mxu0 0.0
    %1520 = vmatprep.subr.mxu0 0.0
    %1521 = vmatpush2.msra.mxu0 0.0
    %1522 = vmatprep.subr.mxu0 0.0
    %1523 = vmatpush2.msra.mxu0 0.0
    %1524 = vmatprep.subr.mxu0 0.0
    %1525 = vmatpush2.msra.mxu0 0.0
    %1526 = vmatprep.subr.mxu0 0.0
    %1527 = vmatpush2.msra.mxu0 0.0
    %1528 = vmatprep.subr.mxu0 0.0
    %1529 = vmatpush2.msra.mxu0 0.0
    %1530 = vmatprep.subr.mxu0 0.0
    %1531 = vmatpush2.msra.mxu0 0.0
    %1532 = vmatprep.subr.mxu0 0.0
    %1533 = vmatpush2.msra.mxu0 0.0
    %1534 = vmatprep.subr.mxu0 0.0
    %1535 = vmatpush2.msra.mxu0 0.0
    %1536 = vmatprep.subr.mxu0 0.0
    %1537 = vmatpush2.msra.mxu0 0.0
    %1538 = vmatprep.subr.mxu0 0.0
    %1539 = vmatpush2.msra.mxu0 0.0
    %1540 = vmatprep.subr.mxu0 0.0
    %1541 = vmatpush2.msra.mxu0 0.0
    %1542 = vmatprep.mubr.f32.mxu0 0.0
    %1543 = vmatmul.mubr.f32.gmra.mxu0 %v1473
    %v1544 = vpop.f32.mrf.mxu0
    %v1545 = vadd.f32 %v1470, %v1544
    %v1546 = vpop.f32.mrf.mxu0
    %1547 = vmatprep.mubr.f32.mxu0 0.0
    %1548 = vmatmul.mubr.f32.gmra.mxu0 %v1476
    %v1549 = vpop.f32.mrf.mxu0
    %v1550 = vadd.f32 %v1470, %v1549
    %v1551 = vpop.f32.mrf.mxu0
    %1552 = vdwg.mxu0
    %v1553 = vadd.f32 %v1314, %v1545
    %v1554 = vadd.f32 %v1315, %v1550
    %1555 = vst.msk [vmem:[#allocation2] sm:$0xff] %vm32, %v1553
    %1556 = vst.msk [vmem:[#allocation2 + $0x8] sm:$0xff] %vm32, %v1554
    // Predicated region
    $region30: #{encoder_layer.1} parent=1 // pred_check
      _
    $region31: #{encoder_layer.1} parent=1 // pred_check_branch
      %1558 = sbr.rel (0) target = $region33
    $region32: #{encoder_layer.1} parent=1 // pred_region
      %s1560 = ssub.s32 256, 256
      %1561 = vsyncadd [#allocation3], %s1560
      %s1562 = sshll.u32 [#allocation2], 4
      %s1563 = int_to_ptr.vmem [resolvable:$true] %s1562
      %1568 = dma.vmem_to_hbm [thread:$0]  %s1563, 256, %s7, [#allocation3], 128, 128, 8
    $region33: #{encoder_layer.1} parent=1 // pred_fallthru
      _
    // Predicated region
    $region34: #{encoder_layer.1} parent=1 // pred_check
      _
    $region35: #{encoder_layer.1} parent=1 // pred_check_branch
      %1570 = sbr.rel (0) target = $region37
    $region36: #{encoder_layer.1} parent=1 // pred_region
      %1571 = dma.done [#allocation3], 256
    $region37: #{encoder_layer.1} parent=1 // pred_fallthru
      _
    %1572 = vsyncpa [#allocation3], 1

</llo_original>
